<compile_context>
chip_gen: v5e
topology: v5e:2x2
jax: 0.10.0
libtpu: 0.0.40
codegen_flags: <defaults>
</compile_context>

<pallas_src>
import jax
import jax.numpy as jnp
from jax.experimental import pallas as pl
from jax.experimental.pallas import tpu as pltpu


def mlp_kernel(x_ref, w1_ref, b1_ref, w2_ref, b2_ref, logits_ref, probs_ref):
    C = logits_ref.shape[-1]  # logical (unpadded) class count; static

    x = x_ref[...]  # (TB, F) bf16

    # Hidden layer: bf16 x bf16 -> f32 accumulate on the MXU, f32 bias add.
    h = jnp.dot(x, w1_ref[...], preferred_element_type=jnp.float32) + b1_ref[...]
    # sigmoid(z) = 0.5 * (tanh(z/2) + 1): single EUP op, no VALU divide.
    h = 0.5 * (jnp.tanh(0.5 * h) + 1.0)
    h = h.astype(w2_ref.dtype)  # bf16 for full MXU rate on the second matmul

    # Output layer over the lane-padded class dim CP. Padded hidden rows of w2 are exactly
    # zero, so sigmoid(0)=0.5 values in padded hidden lanes contribute nothing.
    logits = jnp.dot(h, w2_ref[...], preferred_element_type=jnp.float32) + b2_ref[...]

    # Store only the logical C class lanes (cuts output write bytes vs lane-padded stores).
    logits_ref[...] = logits[:, :C].astype(logits_ref.dtype)

    # Numerically stable softmax over the padded lane dim. Padded class lanes carry a bias
    # of -1e30, so exp(logits - m) underflows to 0 there and they drop out of the sum.
    m = jnp.max(logits, axis=1, keepdims=True)
    e = jnp.exp(logits - m)
    denom = jnp.sum(e, axis=1, keepdims=True)
    # EUP approximate reciprocal seed + one Newton step: keeps the divide off the VALU while
    # making sum(probs) == 1 to ~f32 accuracy (raw approx alone drifts ~1e-3..1e-2).
    inv = pl.reciprocal(denom, approx=True)
    inv = inv * (2.0 - denom * inv)
    probs_ref[...] = (e[:, :C] * inv).astype(probs_ref.dtype)


def _round_up(n, m):
    return ((n + m - 1) // m) * m


def pack_mlp_params(w1, b1, w2, b2, *, lane=128, compute_dtype=jnp.bfloat16):
    """One-time packing of PyTorch-layout Linear params (out, in) into kernel layout.

    Weights are transposed to (in, out), zero-padded to 128 lanes on the out dims and cast
    to the matmul compute dtype (bf16). Biases stay f32; padded class lanes of b2 get a
    -1e30 bias so they vanish from the softmax with zero in-kernel masking cost.
    """
    H, F = w1.shape
    C, H2 = w2.shape
    assert H == H2, "weight shapes inconsistent"
    HP = _round_up(H, lane)
    CP = _round_up(C, lane)

    w1_t = jnp.zeros((F, HP), compute_dtype).at[:, :H].set(w1.T.astype(compute_dtype))
    b1_p = jnp.zeros((1, HP), jnp.float32).at[:, :H].set(b1.astype(jnp.float32))
    w2_t = jnp.zeros((HP, CP), compute_dtype).at[:H, :C].set(w2.T.astype(compute_dtype))
    b2_p = jnp.full((1, CP), -1e30, jnp.float32).at[:, :C].set(b2.astype(jnp.float32))

    return {"w1": w1_t, "b1": b1_p, "w2": w2_t, "b2": b2_p,
            "num_hidden": H, "num_classes": C}


def mlp_forward(x, params, *, block_b=512):
    """x: (B, F) float; params from pack_mlp_params. Returns (logits, probs), each (B, C) f32."""
    w1_t, b1_p, w2_t, b2_p = params["w1"], params["b1"], params["w2"], params["b2"]
    C = params["num_classes"]

    B, F = x.shape
    F2, HP = w1_t.shape
    HP2, CP = w2_t.shape
    assert F == F2 and HP == HP2, "packed params inconsistent with input"

    SUB = 8  # f32/bf16 sublane pack granularity for the batch (second-minor) dim

    # Batch tile: large (amortizes the ~0.35 us/step pipeline overhead), multiple of 8.
    TB = min(_round_up(block_b, SUB), _round_up(B, SUB))
    # Keep >= 2 grid steps so the "parallel" batch axis can shard across both v7x cores.
    if _round_up(B, SUB) // TB < 2 and _round_up(B, SUB) >= 2 * SUB:
        TB = _round_up(-(-B // 2), SUB)
    BP = _round_up(B, TB)

    # Cast to the matmul compute dtype; only materialize a zero-padded copy if TB doesn't
    # divide B (avoids an extra HBM write+read of x on the common path).
    x_c = x.astype(w1_t.dtype)
    if BP != B:
        x_c = jnp.zeros((BP, F), w1_t.dtype).at[:B, :].set(x_c)

    grid = (BP // TB,)

    # VMEM budget from actual sizes (weights resident + double-buffered x/outputs + f32
    # intermediates), with 2x headroom, clamped to 48 MiB so it fits v7x's 64 MiB per-TC VMEM.
    bytes_weights = (w1_t.size * w1_t.dtype.itemsize + w2_t.size * w2_t.dtype.itemsize
                     + b1_p.size * 4 + b2_p.size * 4)
    bytes_x_tile = TB * F * x_c.dtype.itemsize
    bytes_out_tile = 2 * TB * C * 4
    bytes_interm = 6 * TB * max(HP, CP) * 4
    est = 2 * bytes_weights + 2 * bytes_x_tile + 2 * bytes_out_tile + bytes_interm
    vmem_limit = int(min(max(2 * est, 8 << 20), 48 << 20))

    out_shape = (jax.ShapeDtypeStruct((BP, C), jnp.float32),   # logits
                 jax.ShapeDtypeStruct((BP, C), jnp.float32))   # probs

    def run(single_buffer_weights):
        # Grid-invariant weights/biases: constant index_map keeps them VMEM-resident; request
        # a single buffer so they aren't double-buffered (halves their VMEM footprint).
        wkw = {"pipeline_mode": pl.Buffered(1)} if single_buffer_weights else {}
        in_specs = [
            pl.BlockSpec((TB, F), lambda i: (i, 0)),          # x: tiled over batch
            pl.BlockSpec((F, HP), lambda i: (0, 0), **wkw),   # w1: resident
            pl.BlockSpec((1, HP), lambda i: (0, 0), **wkw),   # b1: resident
            pl.BlockSpec((HP, CP), lambda i: (0, 0), **wkw),  # w2: resident
            pl.BlockSpec((1, CP), lambda i: (0, 0), **wkw),   # b2: resident
        ]
        out_specs = [
            pl.BlockSpec((TB, C), lambda i: (i, 0)),
            pl.BlockSpec((TB, C), lambda i: (i, 0)),
        ]
        out = pl.pallas_call(
            mlp_kernel,
            out_shape=out_shape,
            grid_spec=pltpu.PrefetchScalarGridSpec(
                num_scalar_prefetch=0,
                grid=grid,
                in_specs=in_specs,
                out_specs=out_specs,
            ),
            compiler_params=pltpu.CompilerParams(
                dimension_semantics=("parallel",),  # megacore sharding of the batch axis
                vmem_limit_bytes=vmem_limit,
            ),
        )(x_c, w1_t, b1_p, w2_t, b2_p)
        jax.block_until_ready(out)
        return out

    try:
        logits_p, probs_p = run(True)
    except Exception:
        # Fallback if pipeline_mode=pl.Buffered(1) isn't supported on this jax version.
        logits_p, probs_p = run(False)

    # Drop padded batch rows (no-op when TB divides B).
    return logits_p[:B], probs_p[:B]


if __name__ == "__main__":
    # Small shapes consistent with the module: x is (batch, num_features).
    batch, num_features, num_hidden, num_classes = 128, 32, 64, 16

    key = jax.random.PRNGKey(0)
    kx, kw1, kb1, kw2, kb2 = jax.random.split(key, 5)

    x = jax.random.normal(kx, (batch, num_features), dtype=jnp.float32)

    # Init mimicking torch.nn.Linear: U(-1/sqrt(fan_in), 1/sqrt(fan_in)); PyTorch (out, in) layout.
    bound1 = 1.0 / jnp.sqrt(num_features)
    w1 = jax.random.uniform(kw1, (num_hidden, num_features), minval=-bound1, maxval=bound1, dtype=jnp.float32)
    b1 = jax.random.uniform(kb1, (num_hidden,), minval=-bound1, maxval=bound1, dtype=jnp.float32)

    bound2 = 1.0 / jnp.sqrt(num_hidden)
    w2 = jax.random.uniform(kw2, (num_classes, num_hidden), minval=-bound2, maxval=bound2, dtype=jnp.float32)
    b2 = jax.random.uniform(kb2, (num_classes,), minval=-bound2, maxval=bound2, dtype=jnp.float32)

    # One-time parameter packing (transpose + lane-pad + bf16 cast), then the fused forward.
    params = pack_mlp_params(w1, b1, w2, b2)
    # block_b=64 -> grid of 2 balanced steps, exercising the batch-tiled pipeline at small scale.
    logits, probs = mlp_forward(x, params, block_b=64)
    jax.block_until_ready((logits, probs))

    # Reference in plain JAX (f32).
    h_ref = jax.nn.sigmoid(x @ w1.T + b1)
    logits_ref = h_ref @ w2.T + b2
    probs_ref = jax.nn.softmax(logits_ref, axis=1)

    assert logits.shape == (batch, num_classes) and probs.shape == (batch, num_classes)
    # bf16 operands with f32 accumulation -> small, bounded error on logits/probs.
    assert jnp.allclose(logits, logits_ref, atol=2e-2, rtol=2e-2), "logits mismatch"
    assert jnp.allclose(probs, probs_ref, atol=1e-2, rtol=1e-2), "probs mismatch"
    # Newton-refined reciprocal -> probabilities normalized to well under 1e-3.
    assert jnp.allclose(jnp.sum(probs, axis=1), 1.0, atol=1e-3), "probs not normalized"

    print("KERNEL_OK")
</pallas_src>

<mosaic_0001>
module attributes {stable_mosaic.version = 11 : i64} {
  func.func @mlp_kernel(%arg0: i32, %arg1: memref<64x32xbf16, #tpu.memory_space<vmem>>, %arg2: memref<32x128xbf16, #tpu.memory_space<vmem>>, %arg3: memref<1x128xf32, #tpu.memory_space<vmem>>, %arg4: memref<128x128xbf16, #tpu.memory_space<vmem>>, %arg5: memref<1x128xf32, #tpu.memory_space<vmem>>, %arg6: memref<64x16xf32, #tpu.memory_space<vmem>>, %arg7: memref<64x16xf32, #tpu.memory_space<vmem>>) attributes {dimension_semantics = [#tpu.dimension_semantics<parallel>], iteration_bounds = array<i64: 2>, scalar_prefetch = 0 : i64, scratch_operands = 0 : i64, tpu.core_type = #tpu.core_type<tc>, window_params = [{transform_indices = @transform_0, window_bounds = array<i64: 64, 32>}, {pipeline_mode = #tpu.pipeline_mode<synchronous>, transform_indices = @transform_1, window_bounds = array<i64: 32, 128>}, {pipeline_mode = #tpu.pipeline_mode<synchronous>, transform_indices = @transform_2, window_bounds = array<i64: 1, 128>}, {pipeline_mode = #tpu.pipeline_mode<synchronous>, transform_indices = @transform_3, window_bounds = array<i64: 128, 128>}, {pipeline_mode = #tpu.pipeline_mode<synchronous>, transform_indices = @transform_4, window_bounds = array<i64: 1, 128>}, {transform_indices = @transform_5, window_bounds = array<i64: 64, 16>}, {transform_indices = @transform_6, window_bounds = array<i64: 64, 16>}]} {
    %c0 = arith.constant 0 : index
    %c0_0 = arith.constant 0 : index
    %0 = vector.load %arg1[%c0, %c0_0] : memref<64x32xbf16, #tpu.memory_space<vmem>>, vector<64x32xbf16>
    %c0_1 = arith.constant 0 : index
    %c0_2 = arith.constant 0 : index
    %1 = vector.load %arg2[%c0_1, %c0_2] : memref<32x128xbf16, #tpu.memory_space<vmem>>, vector<32x128xbf16>
    %cst = arith.constant dense<0.000000e+00> : vector<64x128xf32>
    %2 = tpu.matmul %0, %1, %cst {dimension_numbers = #tpu.dot_dimension_numbers<[1], [0], [0], [1], [0, 0, 1, 1], [], []>} : vector<64x32xbf16>, vector<32x128xbf16>, vector<64x128xf32> -> vector<64x128xf32>
    %c0_3 = arith.constant 0 : index
    %c0_4 = arith.constant 0 : index
    %3 = vector.load %arg3[%c0_3, %c0_4] : memref<1x128xf32, #tpu.memory_space<vmem>>, vector<1x128xf32>
    %4 = vector.broadcast %3 : vector<1x128xf32> to vector<64x128xf32>
    %5 = arith.addf %2, %4 : vector<64x128xf32>
    %cst_5 = arith.constant 5.000000e-01 : f32
    %6 = vector.broadcast %cst_5 : f32 to vector<64x128xf32>
    %7 = arith.mulf %6, %5 : vector<64x128xf32>
    %8 = math.tanh %7 : vector<64x128xf32>
    %cst_6 = arith.constant 1.000000e+00 : f32
    %9 = vector.broadcast %cst_6 : f32 to vector<64x128xf32>
    %10 = arith.addf %8, %9 : vector<64x128xf32>
    %cst_7 = arith.constant 5.000000e-01 : f32
    %11 = vector.broadcast %cst_7 : f32 to vector<64x128xf32>
    %12 = arith.mulf %11, %10 : vector<64x128xf32>
    %13 = arith.truncf %12 : vector<64x128xf32> to vector<64x128xbf16>
    %c0_8 = arith.constant 0 : index
    %c0_9 = arith.constant 0 : index
    %14 = vector.load %arg4[%c0_8, %c0_9] : memref<128x128xbf16, #tpu.memory_space<vmem>>, vector<128x128xbf16>
    %cst_10 = arith.constant dense<0.000000e+00> : vector<64x128xf32>
    %15 = tpu.matmul %13, %14, %cst_10 {dimension_numbers = #tpu.dot_dimension_numbers<[1], [0], [0], [1], [0, 0, 1, 1], [], []>} : vector<64x128xbf16>, vector<128x128xbf16>, vector<64x128xf32> -> vector<64x128xf32>
    %c0_11 = arith.constant 0 : index
    %c0_12 = arith.constant 0 : index
    %16 = vector.load %arg5[%c0_11, %c0_12] : memref<1x128xf32, #tpu.memory_space<vmem>>, vector<1x128xf32>
    %17 = vector.broadcast %16 : vector<1x128xf32> to vector<64x128xf32>
    %18 = arith.addf %15, %17 : vector<64x128xf32>
    %19 = vector.extract_strided_slice %18 {offsets = [0, 0], sizes = [64, 16], strides = [1, 1]} : vector<64x128xf32> to vector<64x16xf32>
    %c0_13 = arith.constant 0 : index
    %c0_14 = arith.constant 0 : index
    %20 = vector.load %arg6[%c0_13, %c0_14] : memref<64x16xf32, #tpu.memory_space<vmem>>, vector<64x16xf32>
    tpu.vector_store %arg6[%c0_13, %c0_14], %19 {strides = array<i32>} : memref<64x16xf32, #tpu.memory_space<vmem>>, vector<64x16xf32>,
    %cst_15 = arith.constant dense<0xFF800000> : vector<64xf32>
    %21 = vector.multi_reduction <maximumf>, %18, %cst_15 [1] : vector<64x128xf32> to vector<64xf32>
    %22 = vector.shape_cast %21 : vector<64xf32> to vector<64x1xf32>
    %23 = vector.broadcast %22 : vector<64x1xf32> to vector<64x128xf32>
    %24 = arith.subf %18, %23 : vector<64x128xf32>
    %25 = math.exp %24 : vector<64x128xf32>
    %cst_16 = arith.constant dense<0.000000e+00> : vector<64xf32>
    %26 = vector.multi_reduction <add>, %25, %cst_16 [1] : vector<64x128xf32> to vector<64xf32>
    %27 = vector.shape_cast %26 : vector<64xf32> to vector<64x1xf32>
    %28 = tpu.reciprocal %27 {approx = true} : vector<64x1xf32> -> vector<64x1xf32>
    %29 = arith.mulf %27, %28 : vector<64x1xf32>
    %cst_17 = arith.constant 2.000000e+00 : f32
    %30 = vector.broadcast %cst_17 : f32 to vector<64x1xf32>
    %31 = arith.subf %30, %29 : vector<64x1xf32>
    %32 = arith.mulf %28, %31 : vector<64x1xf32>
    %33 = vector.extract_strided_slice %25 {offsets = [0, 0], sizes = [64, 16], strides = [1, 1]} : vector<64x128xf32> to vector<64x16xf32>
    %34 = vector.broadcast %32 : vector<64x1xf32> to vector<64x16xf32>
    %35 = arith.mulf %33, %34 : vector<64x16xf32>
    %c0_18 = arith.constant 0 : index
    %c0_19 = arith.constant 0 : index
    %36 = vector.load %arg7[%c0_18, %c0_19] : memref<64x16xf32, #tpu.memory_space<vmem>>, vector<64x16xf32>
    tpu.vector_store %arg7[%c0_18, %c0_19], %35 {strides = array<i32>} : memref<64x16xf32, #tpu.memory_space<vmem>>, vector<64x16xf32>,
    return
  }
  func.func @transform_0(%arg0: i32) -> (i32, i32) {
    %c0_i32 = arith.constant 0 : i32
    %c0_i32_0 = arith.constant 0 : i32
    return %arg0, %c0_i32 : i32, i32
  }
  func.func @transform_1(%arg0: i32) -> (i32, i32) {
    %c0_i32 = arith.constant 0 : i32
    %c0_i32_0 = arith.constant 0 : i32
    %c0_i32_1 = arith.constant 0 : i32
    return %c0_i32, %c0_i32_0 : i32, i32
  }
  func.func @transform_2(%arg0: i32) -> (i32, i32) {
    %c0_i32 = arith.constant 0 : i32
    %c0_i32_0 = arith.constant 0 : i32
    %c0_i32_1 = arith.constant 0 : i32
    return %c0_i32, %c0_i32_0 : i32, i32
  }
  func.func @transform_3(%arg0: i32) -> (i32, i32) {
    %c0_i32 = arith.constant 0 : i32
    %c0_i32_0 = arith.constant 0 : i32
    %c0_i32_1 = arith.constant 0 : i32
    return %c0_i32, %c0_i32_0 : i32, i32
  }
  func.func @transform_4(%arg0: i32) -> (i32, i32) {
    %c0_i32 = arith.constant 0 : i32
    %c0_i32_0 = arith.constant 0 : i32
    %c0_i32_1 = arith.constant 0 : i32
    return %c0_i32, %c0_i32_0 : i32, i32
  }
  func.func @transform_5(%arg0: i32) -> (i32, i32) {
    %c0_i32 = arith.constant 0 : i32
    %c0_i32_0 = arith.constant 0 : i32
    return %arg0, %c0_i32 : i32, i32
  }
  func.func @transform_6(%arg0: i32) -> (i32, i32) {
    %c0_i32 = arith.constant 0 : i32
    %c0_i32_0 = arith.constant 0 : i32
    return %arg0, %c0_i32 : i32, i32
  }
}

module attributes {stable_mosaic.version = 11 : i64} {
  func.func @mlp_kernel(%arg0: i32, %arg1: memref<64x32xbf16, #tpu.memory_space<vmem>>, %arg2: memref<32x128xbf16, #tpu.memory_space<vmem>>, %arg3: memref<1x128xf32, #tpu.memory_space<vmem>>, %arg4: memref<128x128xbf16, #tpu.memory_space<vmem>>, %arg5: memref<1x128xf32, #tpu.memory_space<vmem>>, %arg6: memref<64x16xf32, #tpu.memory_space<vmem>>, %arg7: memref<64x16xf32, #tpu.memory_space<vmem>>) attributes {dimension_semantics = [#tpu.dimension_semantics<parallel>], iteration_bounds = array<i64: 2>, scalar_prefetch = 0 : i64, scratch_operands = 0 : i64, tpu.core_type = #tpu.core_type<tc>, window_params = [{transform_indices = @transform_0, window_bounds = array<i64: 64, 32>}, {pipeline_mode = #tpu.pipeline_mode<synchronous>, transform_indices = @transform_1, window_bounds = array<i64: 32, 128>}, {pipeline_mode = #tpu.pipeline_mode<synchronous>, transform_indices = @transform_2, window_bounds = array<i64: 1, 128>}, {pipeline_mode = #tpu.pipeline_mode<synchronous>, transform_indices = @transform_3, window_bounds = array<i64: 128, 128>}, {pipeline_mode = #tpu.pipeline_mode<synchronous>, transform_indices = @transform_4, window_bounds = array<i64: 1, 128>}, {transform_indices = @transform_5, window_bounds = array<i64: 64, 16>}, {transform_indices = @transform_6, window_bounds = array<i64: 64, 16>}]} {
    %c0 = arith.constant 0 : index
    %c0_0 = arith.constant 0 : index
    %0 = vector.load %arg1[%c0, %c0_0] : memref<64x32xbf16, #tpu.memory_space<vmem>>, vector<64x32xbf16>
    %c0_1 = arith.constant 0 : index
    %c0_2 = arith.constant 0 : index
    %1 = vector.load %arg2[%c0_1, %c0_2] : memref<32x128xbf16, #tpu.memory_space<vmem>>, vector<32x128xbf16>
    %cst = arith.constant dense<0.000000e+00> : vector<64x128xf32>
    %2 = tpu.matmul %0, %1, %cst {dimension_numbers = #tpu.dot_dimension_numbers<[1], [0], [0], [1], [0, 0, 1, 1], [], []>} : vector<64x32xbf16>, vector<32x128xbf16>, vector<64x128xf32> -> vector<64x128xf32>
    %c0_3 = arith.constant 0 : index
    %c0_4 = arith.constant 0 : index
    %3 = vector.load %arg3[%c0_3, %c0_4] : memref<1x128xf32, #tpu.memory_space<vmem>>, vector<1x128xf32>
    %4 = vector.broadcast %3 : vector<1x128xf32> to vector<64x128xf32>
    %5 = arith.addf %2, %4 : vector<64x128xf32>
    %cst_5 = arith.constant 5.000000e-01 : f32
    %6 = vector.broadcast %cst_5 : f32 to vector<64x128xf32>
    %7 = arith.mulf %6, %5 : vector<64x128xf32>
    %8 = math.tanh %7 : vector<64x128xf32>
    %cst_6 = arith.constant 1.000000e+00 : f32
    %9 = vector.broadcast %cst_6 : f32 to vector<64x128xf32>
    %10 = arith.addf %8, %9 : vector<64x128xf32>
    %cst_7 = arith.constant 5.000000e-01 : f32
    %11 = vector.broadcast %cst_7 : f32 to vector<64x128xf32>
    %12 = arith.mulf %11, %10 : vector<64x128xf32>
    %13 = arith.truncf %12 : vector<64x128xf32> to vector<64x128xbf16>
    %c0_8 = arith.constant 0 : index
    %c0_9 = arith.constant 0 : index
    %14 = vector.load %arg4[%c0_8, %c0_9] : memref<128x128xbf16, #tpu.memory_space<vmem>>, vector<128x128xbf16>
    %cst_10 = arith.constant dense<0.000000e+00> : vector<64x128xf32>
    %15 = tpu.matmul %13, %14, %cst_10 {dimension_numbers = #tpu.dot_dimension_numbers<[1], [0], [0], [1], [0, 0, 1, 1], [], []>} : vector<64x128xbf16>, vector<128x128xbf16>, vector<64x128xf32> -> vector<64x128xf32>
    %c0_11 = arith.constant 0 : index
    %c0_12 = arith.constant 0 : index
    %16 = vector.load %arg5[%c0_11, %c0_12] : memref<1x128xf32, #tpu.memory_space<vmem>>, vector<1x128xf32>
    %17 = vector.broadcast %16 : vector<1x128xf32> to vector<64x128xf32>
    %18 = arith.addf %15, %17 : vector<64x128xf32>
    %19 = vector.extract_strided_slice %18 {offsets = [0, 0], sizes = [64, 16], strides = [1, 1]} : vector<64x128xf32> to vector<64x16xf32>
    %c0_13 = arith.constant 0 : index
    %c0_14 = arith.constant 0 : index
    %20 = vector.load %arg6[%c0_13, %c0_14] : memref<64x16xf32, #tpu.memory_space<vmem>>, vector<64x16xf32>
    tpu.vector_store %arg6[%c0_13, %c0_14], %19 {strides = array<i32>} : memref<64x16xf32, #tpu.memory_space<vmem>>, vector<64x16xf32>,
    %cst_15 = arith.constant dense<0xFF800000> : vector<64xf32>
    %21 = vector.multi_reduction <maximumf>, %18, %cst_15 [1] : vector<64x128xf32> to vector<64xf32>
    %22 = vector.shape_cast %21 : vector<64xf32> to vector<64x1xf32>
    %23 = vector.broadcast %22 : vector<64x1xf32> to vector<64x128xf32>
    %24 = arith.subf %18, %23 : vector<64x128xf32>
    %25 = math.exp %24 : vector<64x128xf32>
    %cst_16 = arith.constant dense<0.000000e+00> : vector<64xf32>
    %26 = vector.multi_reduction <add>, %25, %cst_16 [1] : vector<64x128xf32> to vector<64xf32>
    %27 = vector.shape_cast %26 : vector<64xf32> to vector<64x1xf32>
    %28 = tpu.reciprocal %27 {approx = true} : vector<64x1xf32> -> vector<64x1xf32>
    %29 = arith.mulf %27, %28 : vector<64x1xf32>
    %cst_17 = arith.constant 2.000000e+00 : f32
    %30 = vector.broadcast %cst_17 : f32 to vector<64x1xf32>
    %31 = arith.subf %30, %29 : vector<64x1xf32>
    %32 = arith.mulf %28, %31 : vector<64x1xf32>
    %33 = vector.extract_strided_slice %25 {offsets = [0, 0], sizes = [64, 16], strides = [1, 1]} : vector<64x128xf32> to vector<64x16xf32>
    %34 = vector.broadcast %32 : vector<64x1xf32> to vector<64x16xf32>
    %35 = arith.mulf %33, %34 : vector<64x16xf32>
    %c0_18 = arith.constant 0 : index
    %c0_19 = arith.constant 0 : index
    %36 = vector.load %arg7[%c0_18, %c0_19] : memref<64x16xf32, #tpu.memory_space<vmem>>, vector<64x16xf32>
    tpu.vector_store %arg7[%c0_18, %c0_19], %35 {strides = array<i32>} : memref<64x16xf32, #tpu.memory_space<vmem>>, vector<64x16xf32>,
    return
  }
  func.func @transform_0(%arg0: i32) -> (i32, i32) {
    %c0_i32 = arith.constant 0 : i32
    %c0_i32_0 = arith.constant 0 : i32
    return %arg0, %c0_i32 : i32, i32
  }
  func.func @transform_1(%arg0: i32) -> (i32, i32) {
    %c0_i32 = arith.constant 0 : i32
    %c0_i32_0 = arith.constant 0 : i32
    %c0_i32_1 = arith.constant 0 : i32
    return %c0_i32, %c0_i32_0 : i32, i32
  }
  func.func @transform_2(%arg0: i32) -> (i32, i32) {
    %c0_i32 = arith.constant 0 : i32
    %c0_i32_0 = arith.constant 0 : i32
    %c0_i32_1 = arith.constant 0 : i32
    return %c0_i32, %c0_i32_0 : i32, i32
  }
  func.func @transform_3(%arg0: i32) -> (i32, i32) {
    %c0_i32 = arith.constant 0 : i32
    %c0_i32_0 = arith.constant 0 : i32
    %c0_i32_1 = arith.constant 0 : i32
    return %c0_i32, %c0_i32_0 : i32, i32
  }
  func.func @transform_4(%arg0: i32) -> (i32, i32) {
    %c0_i32 = arith.constant 0 : i32
    %c0_i32_0 = arith.constant 0 : i32
    %c0_i32_1 = arith.constant 0 : i32
    return %c0_i32, %c0_i32_0 : i32, i32
  }
  func.func @transform_5(%arg0: i32) -> (i32, i32) {
    %c0_i32 = arith.constant 0 : i32
    %c0_i32_0 = arith.constant 0 : i32
    return %arg0, %c0_i32 : i32, i32
  }
  func.func @transform_6(%arg0: i32) -> (i32, i32) {
    %c0_i32 = arith.constant 0 : i32
    %c0_i32_0 = arith.constant 0 : i32
    return %arg0, %c0_i32 : i32, i32
  }
}

</mosaic_0001>

<llo_original>
// kernel: tpu_custom_call.1
$region0: #{tpu_custom_call.1}
  #allocation0 [shape = 'u32[]', space=smem, size = 0x4, offset = 0x4, fixed_abs, tag = 'smem constant byte address 0x4 - core index']
  #allocation1 [shape = 'u32[72,128]{1,0:T(1,128)}', space=vmem, size = 0x9000, scoped, tag = 'internal scratch']
  %s0 = inlined_call_operand.vmem [shape: bf16[128,32], index: 0, kind: input, shape index: {}]
  %s1 = inlined_call_operand.vmem [shape: bf16[32,128], index: 1, kind: input, shape index: {}]
  %s2 = inlined_call_operand.vmem [shape: f32[1,128], index: 2, kind: input, shape index: {}]
  %s3 = inlined_call_operand.vmem [shape: bf16[128,128], index: 3, kind: input, shape index: {}]
  %s4 = inlined_call_operand.vmem [shape: f32[1,128], index: 4, kind: input, shape index: {}]
  %s5 = inlined_call_operand.vmem [shape: f32[128,16], index: 5, kind: output, shape index: {0}]
  %s6 = inlined_call_operand.vmem [shape: f32[128,16], index: 6, kind: output, shape index: {1}]
  %7 = xla_tuple %s5, %s6
  %s8 = sld [smem:[#allocation0]]
  $region61: #{tpu_custom_call.1} parent=0
    _
  %s10 = ssub.s32 1, %s8
  %s11 = scalar_select 0, %s10, %s8
  loop: start=0, step=1, limit=4
  $region2: #{tpu_custom_call.1} parent=0 // loop_pre_header
    _
  $region3: #{tpu_custom_call.1} parent=0 // loop_header
    %s13 = sphi 0, %s17
    %p14 = scmp.ge.s32.totalorder %s13, 4
    %s23 = sphi 0, %s25
    %s26 = sphi 0, %s23
    %s27 = sphi 0, %s26
    %s43 = sphi 0, %s27
    %s47 = sphi 0, %s47
    %s49 = sphi 0, %s47
    %s50 = sphi 0, %s49
    %s64 = sphi 0, %s50
    %s68 = sphi 0, %s68
    %s70 = sphi 0, %s68
    %s71 = sphi 0, %s70
    %s85 = sphi 0, %s71
    %s89 = sphi 0, %s89
    %s91 = sphi 0, %s89
    %s92 = sphi 0, %s91
    %s106 = sphi 0, %s92
    %s110 = sphi 0, %s110
    %s112 = sphi 0, %s110
    %s113 = sphi 0, %s112
    %s127 = sphi 0, %s113
    %s133 = sphi 0, %s135
    %s136 = sphi 0, %s133
    %s137 = sphi 0, %s136
    %s153 = sphi 0, %s137
    %s159 = sphi 0, %s161
    %s162 = sphi 0, %s159
    %s163 = sphi 0, %s162
    %s179 = sphi 0, %s163
  $region4: #{tpu_custom_call.1} parent=0 // loop_header_branch
    %16 = sbr.rel (%p14) target = $region8
  $region5: #{tpu_custom_call.1} parent=0 // loop_body
    %s18 = ssub.s32 %s13, 1
    %s19 = ssub.s32 %s13, 2
    %s20 = sadd.s32 %s13, 1
    %s21 = ssub.s32 %s13, %s20
    %p22 = scmp.eq.s32.totalorder %s21, 0
    %s24 = sadd.s32 %s23, 1
    %s25 = scalar_select %p22, %s23, %s24
    %p28 = pneg %p22
    %p29 = scmp.eq.s32.totalorder %s13, 1
    %p30 = por %p28, %p29
    %p31 = scmp.ne.s32.totalorder %s23, %s26
    %p32 = scmp.eq.s32.totalorder %s13, 0
    %p33 = por %p31, %p32
    %p34 = scmp.ne.s32.totalorder %s23, %s26
    %p35 = scmp.eq.s32.totalorder %s18, 1
    %p36 = por %p34, %p35
    %p37 = scmp.ne.s32.totalorder %s26, %s27
    %p38 = scmp.eq.s32.totalorder %s18, 0
    %p39 = por %p37, %p38
    %p40 = scmp.ne.s32.totalorder %s26, %s27
    %p41 = scmp.eq.s32.totalorder %s19, 1
    %p42 = por %p40, %p41
    %p44 = scmp.ne.s32.totalorder %s27, %s43
    %p45 = scmp.eq.s32.totalorder %s19, 0
    %p46 = por %p44, %p45
    %s48 = sadd.s32 %s47, 1
    %p51 = scmp.eq.s32.totalorder %s13, 1
    %p52 = scmp.ne.s32.totalorder %s47, %s49
    %p53 = scmp.eq.s32.totalorder %s13, 0
    %p54 = por %p52, %p53
    %p55 = scmp.ne.s32.totalorder %s47, %s49
    %p56 = scmp.eq.s32.totalorder %s18, 1
    %p57 = por %p55, %p56
    %p58 = scmp.ne.s32.totalorder %s49, %s50
    %p59 = scmp.eq.s32.totalorder %s18, 0
    %p60 = por %p58, %p59
    %p61 = scmp.ne.s32.totalorder %s49, %s50
    %p62 = scmp.eq.s32.totalorder %s19, 1
    %p63 = por %p61, %p62
    %p65 = scmp.ne.s32.totalorder %s50, %s64
    %p66 = scmp.eq.s32.totalorder %s19, 0
    %p67 = por %p65, %p66
    %s69 = sadd.s32 %s68, 1
    %p72 = scmp.eq.s32.totalorder %s13, 1
    %p73 = scmp.ne.s32.totalorder %s68, %s70
    %p74 = scmp.eq.s32.totalorder %s13, 0
    %p75 = por %p73, %p74
    %p76 = scmp.ne.s32.totalorder %s68, %s70
    %p77 = scmp.eq.s32.totalorder %s18, 1
    %p78 = por %p76, %p77
    %p79 = scmp.ne.s32.totalorder %s70, %s71
    %p80 = scmp.eq.s32.totalorder %s18, 0
    %p81 = por %p79, %p80
    %p82 = scmp.ne.s32.totalorder %s70, %s71
    %p83 = scmp.eq.s32.totalorder %s19, 1
    %p84 = por %p82, %p83
    %p86 = scmp.ne.s32.totalorder %s71, %s85
    %p87 = scmp.eq.s32.totalorder %s19, 0
    %p88 = por %p86, %p87
    %s90 = sadd.s32 %s89, 1
    %p93 = scmp.eq.s32.totalorder %s13, 1
    %p94 = scmp.ne.s32.totalorder %s89, %s91
    %p95 = scmp.eq.s32.totalorder %s13, 0
    %p96 = por %p94, %p95
    %p97 = scmp.ne.s32.totalorder %s89, %s91
    %p98 = scmp.eq.s32.totalorder %s18, 1
    %p99 = por %p97, %p98
    %p100 = scmp.ne.s32.totalorder %s91, %s92
    %p101 = scmp.eq.s32.totalorder %s18, 0
    %p102 = por %p100, %p101
    %p103 = scmp.ne.s32.totalorder %s91, %s92
    %p104 = scmp.eq.s32.totalorder %s19, 1
    %p105 = por %p103, %p104
    %p107 = scmp.ne.s32.totalorder %s92, %s106
    %p108 = scmp.eq.s32.totalorder %s19, 0
    %p109 = por %p107, %p108
    %s111 = sadd.s32 %s110, 1
    %p114 = scmp.eq.s32.totalorder %s13, 1
    %p115 = scmp.ne.s32.totalorder %s110, %s112
    %p116 = scmp.eq.s32.totalorder %s13, 0
    %p117 = por %p115, %p116
    %p118 = scmp.ne.s32.totalorder %s110, %s112
    %p119 = scmp.eq.s32.totalorder %s18, 1
    %p120 = por %p118, %p119
    %p121 = scmp.ne.s32.totalorder %s112, %s113
    %p122 = scmp.eq.s32.totalorder %s18, 0
    %p123 = por %p121, %p122
    %p124 = scmp.ne.s32.totalorder %s112, %s113
    %p125 = scmp.eq.s32.totalorder %s19, 1
    %p126 = por %p124, %p125
    %p128 = scmp.ne.s32.totalorder %s113, %s127
    %p129 = scmp.eq.s32.totalorder %s19, 0
    %p130 = por %p128, %p129
    %s131 = ssub.s32 %s13, %s20
    %p132 = scmp.eq.s32.totalorder %s131, 0
    %s134 = sadd.s32 %s133, 1
    %s135 = scalar_select %p132, %s133, %s134
    %p138 = pneg %p132
    %p139 = scmp.eq.s32.totalorder %s13, 1
    %p140 = por %p138, %p139
    %p141 = scmp.ne.s32.totalorder %s133, %s136
    %p142 = scmp.eq.s32.totalorder %s13, 0
    %p143 = por %p141, %p142
    %p144 = scmp.ne.s32.totalorder %s133, %s136
    %p145 = scmp.eq.s32.totalorder %s18, 1
    %p146 = por %p144, %p145
    %p147 = scmp.ne.s32.totalorder %s136, %s137
    %p148 = scmp.eq.s32.totalorder %s18, 0
    %p149 = por %p147, %p148
    %p150 = scmp.ne.s32.totalorder %s136, %s137
    %p151 = scmp.eq.s32.totalorder %s19, 1
    %p152 = por %p150, %p151
    %p154 = scmp.ne.s32.totalorder %s137, %s153
    %p155 = scmp.eq.s32.totalorder %s19, 0
    %p156 = por %p154, %p155
    %s157 = ssub.s32 %s13, %s20
    %p158 = scmp.eq.s32.totalorder %s157, 0
    %s160 = sadd.s32 %s159, 1
    %s161 = scalar_select %p158, %s159, %s160
    %p164 = pneg %p158
    %p165 = scmp.eq.s32.totalorder %s13, 1
    %p166 = por %p164, %p165
    %p167 = scmp.ne.s32.totalorder %s159, %s162
    %p168 = scmp.eq.s32.totalorder %s13, 0
    %p169 = por %p167, %p168
    %p170 = scmp.ne.s32.totalorder %s159, %s162
    %p171 = scmp.eq.s32.totalorder %s18, 1
    %p172 = por %p170, %p171
    %p173 = scmp.ne.s32.totalorder %s162, %s163
    %p174 = scmp.eq.s32.totalorder %s18, 0
    %p175 = por %p173, %p174
    %p176 = scmp.ne.s32.totalorder %s162, %s163
    %p177 = scmp.eq.s32.totalorder %s19, 1
    %p178 = por %p176, %p177
    %p180 = scmp.ne.s32.totalorder %s163, %s179
    %p181 = scmp.eq.s32.totalorder %s19, 0
    %p182 = por %p180, %p181
    %p183 = scmp.le.s32.totalorder 1, %s13
    %p184 = scmp.lt.s32.totalorder %s13, 3
    %p185 = pnand %p183, %p184
    %p186 = pneg %p185
    // Predicated region
    $region9: #{tpu_custom_call.1} parent=5 // pred_check
      _
    $region10: #{tpu_custom_call.1} parent=5 // pred_check_branch
      %188 = sbr.rel (%p185) target = $region12
    $region11: #{tpu_custom_call.1} parent=5 // pred_region
      %s189 = ssub.s32 %s13, 1
      // Predicated region
      $region13: #{tpu_custom_call.1} parent=11 // pred_check
        %p190 = pneg %p60
      $region14: #{tpu_custom_call.1} parent=11 // pred_check_branch
        %192 = sbr.rel (%p190) target = $region16
      $region15: #{tpu_custom_call.1} parent=11 // pred_region
        _
      $region16: #{tpu_custom_call.1} parent=11 // pred_fallthru
        _
      // Predicated region
      $region17: #{tpu_custom_call.1} parent=11 // pred_check
        %p193 = pneg %p81
      $region18: #{tpu_custom_call.1} parent=11 // pred_check_branch
        %195 = sbr.rel (%p193) target = $region20
      $region19: #{tpu_custom_call.1} parent=11 // pred_region
        _
      $region20: #{tpu_custom_call.1} parent=11 // pred_fallthru
        _
      // Predicated region
      $region21: #{tpu_custom_call.1} parent=11 // pred_check
        %p196 = pneg %p102
      $region22: #{tpu_custom_call.1} parent=11 // pred_check_branch
        %198 = sbr.rel (%p196) target = $region24
      $region23: #{tpu_custom_call.1} parent=11 // pred_region
        _
      $region24: #{tpu_custom_call.1} parent=11 // pred_fallthru
        _
      // Predicated region
      $region25: #{tpu_custom_call.1} parent=11 // pred_check
        %p199 = pneg %p123
      $region26: #{tpu_custom_call.1} parent=11 // pred_check_branch
        %201 = sbr.rel (%p199) target = $region28
      $region27: #{tpu_custom_call.1} parent=11 // pred_region
        _
      $region28: #{tpu_custom_call.1} parent=11 // pred_fallthru
        _
    $region12: #{tpu_custom_call.1} parent=5 // pred_fallthru
      _
    %p202 = scmp.lt.s32.totalorder %s13, 2
    // Predicated region
    $region29: #{tpu_custom_call.1} parent=5 // pred_check
      %p203 = pneg %p202
    $region30: #{tpu_custom_call.1} parent=5 // pred_check_branch
      %205 = sbr.rel (%p203) target = $region32
    $region31: #{tpu_custom_call.1} parent=5 // pred_region
      // Predicated region
      $region33: #{tpu_custom_call.1} parent=31 // pred_check
        %p206 = pneg %p33
      $region34: #{tpu_custom_call.1} parent=31 // pred_check_branch
        %208 = sbr.rel (%p206) target = $region36
      $region35: #{tpu_custom_call.1} parent=31 // pred_region
        %s209 = smul.u32 8, %s13
        %p210 = scmp.lt.s32.totalorder %s209, 15
        %s211 = scalar_select %p210, %s209, 15
        %s212 = smul.addr %s211, 4
        %s213 = scalar_lea.vmem %s0, %s212
        %s214 = smul.u32 8, %s13
      $region36: #{tpu_custom_call.1} parent=31 // pred_fallthru
        _
    $region32: #{tpu_custom_call.1} parent=5 // pred_fallthru
      _
    %p215 = scmp.le.s32.totalorder 1, %s13
    %p216 = scmp.lt.s32.totalorder %s13, 3
    %p217 = pnand %p215, %p216
    %p218 = pneg %p217
    // Predicated region
    $region37: #{tpu_custom_call.1} parent=5 // pred_check
      _
    $region38: #{tpu_custom_call.1} parent=5 // pred_check_branch
      %220 = sbr.rel (%p217) target = $region40
    $region39: #{tpu_custom_call.1} parent=5 // pred_region
      %s221 = ssub.s32 %s13, 1
      %s222 = smul.u32 8, %s18
      %p223 = scmp.lt.s32.totalorder %s222, 15
      %s224 = scalar_select %p223, %s222, 15
      %s225 = smul.addr %s224, 4
      %s226 = scalar_lea.vmem %s0, %s225
      %p227 = pneg %p39
      %p228 = pneg %p36
      %p229 = pneg %p60
      %p230 = pneg %p57
      %p231 = pneg %p81
      %p232 = pneg %p78
      %p233 = pneg %p102
      %p234 = pneg %p99
      %p235 = pneg %p123
      %p236 = pneg %p120
      %p237 = pneg %p149
      %p238 = pneg %p146
      %s239 = smul.u32 8, %s18
      %p240 = scmp.lt.s32.totalorder %s239, 15
      %s241 = scalar_select %p240, %s239, 15
      %s242 = smul.addr %s241, 8
      %s243 = scalar_lea.vmem %s5, %s242
      %p244 = pneg %p175
      %p245 = pneg %p172
      %s246 = smul.u32 8, %s18
      %p247 = scmp.lt.s32.totalorder %s246, 15
      %s248 = scalar_select %p247, %s246, 15
      %s249 = smul.addr %s248, 8
      %s250 = scalar_lea.vmem %s6, %s249
      %s251 = smul.u32 8, %s18
      %p252 = scmp.lt.s32.totalorder %s251, 15
      %s253 = scalar_select %p252, %s251, 15
      %s254 = smul.addr %s253, 4
      %s255 = scalar_lea.vmem %s0, %s254
      %s256 = smul.u32 8, %s18
      %s257 = smul.u32 8, %s18
      %p258 = scmp.lt.s32.totalorder %s257, 15
      %s259 = scalar_select %p258, %s257, 15
      %s260 = smul.addr %s259, 8
      %s261 = scalar_lea.vmem %s5, %s260
      %s262 = smul.u32 8, %s18
      %s263 = smul.u32 8, %s18
      %p264 = scmp.lt.s32.totalorder %s263, 15
      %s265 = scalar_select %p264, %s263, 15
      %s266 = smul.addr %s265, 8
      %s267 = scalar_lea.vmem %s6, %s266
      %s268 = smul.u32 8, %s18
      %v270 = vld [vmem:[%s255] sm:$0xf]
      %v271 = vld [vmem:[%s255 + $0x4] sm:$0xf]
      %v272 = vld [vmem:[%s255 + $0x8] sm:$0xf]
      %v273 = vld [vmem:[%s255 + $0xc] sm:$0xf]
      %v274 = vld [vmem:[%s255 + $0x10] sm:$0xf]
      %v275 = vld [vmem:[%s255 + $0x14] sm:$0xf]
      %v276 = vld [vmem:[%s255 + $0x18] sm:$0xf]
      %v277 = vld [vmem:[%s255 + $0x1c] sm:$0xf]
      %v278 = vld [vmem:[%s1] sm:$0xf]
      %v279 = vld [vmem:[%s1 + $0x4] sm:$0xf]
      %v280 = vld [vmem:[%s1 + $0x8] sm:$0xf]
      %v281 = vld [vmem:[%s1 + $0xc] sm:$0xf]
      %v282 = vld [vmem:[%s2] sm:$0x1]
      %v284 = vperm.slane %v282, 0
      %v294 = vunpack.c.l.b16 %v270
      %v295 = vunpack.c.l.b16 %v271
      %v296 = vunpack.c.l.b16 %v272
      %v297 = vunpack.c.l.b16 %v273
      %v298 = vunpack.c.l.b16 %v274
      %v299 = vunpack.c.l.b16 %v275
      %v300 = vunpack.c.l.b16 %v276
      %v301 = vunpack.c.l.b16 %v277
      %v302 = vpack.c.b16 %v295, %v294
      %v303 = vpack.c.b16 %v297, %v296
      %v304 = vpack.c.b16 %v299, %v298
      %v305 = vpack.c.b16 %v301, %v300
      %v310 = vunpack.c.l.b16 %v278
      %v311 = vunpack.c.l.b16 %v279
      %v312 = vunpack.c.l.b16 %v280
      %v313 = vunpack.c.l.b16 %v281
      %v314 = vpack.c.b16 %v311, %v310
      %v315 = vpack.c.b16 %v313, %v312
      %vm318 = vcmask 261120
      %v320 = vsel %vm318, %v302, 0
      %v323 = vsel %vm318, %v303, 0
      %v326 = vsel %vm318, %v304, 0
      %v329 = vsel %vm318, %v305, 0
      %331 = vmatpush.bf16.msra.mxu0 0
      %332 = vmatpush.bf16.msra.mxu0 0
      %333 = vmatpush.bf16.msra.mxu0 0
      %334 = vmatpush.bf16.msra.mxu0 0
      %335 = vmatpush.bf16.msra.mxu0 0
      %336 = vmatpush.bf16.msra.mxu0 0
      %337 = vmatpush.bf16.msra.mxu0 %v315
      %338 = vmatpush.bf16.msra.mxu0 %v314
      %339 = vmatmul.bf16.gmra.mxu0 %v320
      %v340 = vpop.f32.mrf.mxu0
      %v341 = vadd.f32 %v284, %v340
      %v342 = vpop.f32.mrf.mxu0
      %v343 = vadd.f32 %v284, %v342
      %344 = vmatmul.bf16.gmra.mxu0 %v323
      %v345 = vpop.f32.mrf.mxu0
      %v346 = vadd.f32 %v284, %v345
      %v347 = vpop.f32.mrf.mxu0
      %v348 = vadd.f32 %v284, %v347
      %349 = vmatmul.bf16.gmra.mxu0 %v326
      %v350 = vpop.f32.mrf.mxu0
      %v351 = vadd.f32 %v284, %v350
      %v352 = vpop.f32.mrf.mxu0
      %v353 = vadd.f32 %v284, %v352
      %354 = vmatmul.bf16.gmra.mxu0 %v329
      %v355 = vpop.f32.mrf.mxu0
      %v356 = vadd.f32 %v284, %v355
      %v357 = vpop.f32.mrf.mxu0
      %v358 = vadd.f32 %v284, %v357
      %359 = vdwg.mxu0
      %v360 = vmul.f32 %v341, 0.5
      %v361 = vmul.f32 %v343, 0.5
      %v362 = vmul.f32 %v346, 0.5
      %v363 = vmul.f32 %v348, 0.5
      %v364 = vmul.f32 %v351, 0.5
      %v365 = vmul.f32 %v353, 0.5
      %v366 = vmul.f32 %v356, 0.5
      %v367 = vmul.f32 %v358, 0.5
      %v368 = vtanh.pop %v360
      %v369 = vtanh.pop %v361
      %v370 = vtanh.pop %v362
      %v371 = vtanh.pop %v363
      %v372 = vtanh.pop %v364
      %v373 = vtanh.pop %v365
      %v374 = vtanh.pop %v366
      %v375 = vtanh.pop %v367
      %v376 = vadd.f32 %v368, 1.0
      %v377 = vadd.f32 %v369, 1.0
      %v378 = vadd.f32 %v370, 1.0
      %v379 = vadd.f32 %v371, 1.0
      %v380 = vadd.f32 %v372, 1.0
      %v381 = vadd.f32 %v373, 1.0
      %v382 = vadd.f32 %v374, 1.0
      %v383 = vadd.f32 %v375, 1.0
      %v384 = vmul.f32 %v376, 0.5
      %v385 = vmul.f32 %v377, 0.5
      %v386 = vmul.f32 %v378, 0.5
      %v387 = vmul.f32 %v379, 0.5
      %v388 = vmul.f32 %v380, 0.5
      %v389 = vmul.f32 %v381, 0.5
      %v390 = vmul.f32 %v382, 0.5
      %v391 = vmul.f32 %v383, 0.5
      %v392 = vpack.c.bf16 %v385, %v384
      %v393 = vpack.c.bf16 %v387, %v386
      %v394 = vpack.c.bf16 %v389, %v388
      %v395 = vpack.c.bf16 %v391, %v390
      %v396 = vld [vmem:[%s3] sm:$0xf]
      %v397 = vld [vmem:[%s3 + $0x4] sm:$0xf]
      %v398 = vld [vmem:[%s3 + $0x8] sm:$0xf]
      %v399 = vld [vmem:[%s3 + $0xc] sm:$0xf]
      %v400 = vld [vmem:[%s3 + $0x10] sm:$0xf]
      %v401 = vld [vmem:[%s3 + $0x14] sm:$0xf]
      %v402 = vld [vmem:[%s3 + $0x18] sm:$0xf]
      %v403 = vld [vmem:[%s3 + $0x1c] sm:$0xf]
      %v404 = vld [vmem:[%s3 + $0x20] sm:$0xf]
      %v405 = vld [vmem:[%s3 + $0x24] sm:$0xf]
      %v406 = vld [vmem:[%s3 + $0x28] sm:$0xf]
      %v407 = vld [vmem:[%s3 + $0x2c] sm:$0xf]
      %v408 = vld [vmem:[%s3 + $0x30] sm:$0xf]
      %v409 = vld [vmem:[%s3 + $0x34] sm:$0xf]
      %v410 = vld [vmem:[%s3 + $0x38] sm:$0xf]
      %v411 = vld [vmem:[%s3 + $0x3c] sm:$0xf]
      %v412 = vld [vmem:[%s4] sm:$0x1]
      %v414 = vperm.slane %v412, 0
      %v432 = vunpack.c.l.b16 %v396
      %v433 = vunpack.c.l.b16 %v397
      %v434 = vunpack.c.l.b16 %v398
      %v435 = vunpack.c.l.b16 %v399
      %v436 = vunpack.c.l.b16 %v400
      %v437 = vunpack.c.l.b16 %v401
      %v438 = vunpack.c.l.b16 %v402
      %v439 = vunpack.c.l.b16 %v403
      %v440 = vunpack.c.l.b16 %v404
      %v441 = vunpack.c.l.b16 %v405
      %v442 = vunpack.c.l.b16 %v406
      %v443 = vunpack.c.l.b16 %v407
      %v444 = vunpack.c.l.b16 %v408
      %v445 = vunpack.c.l.b16 %v409
      %v446 = vunpack.c.l.b16 %v410
      %v447 = vunpack.c.l.b16 %v411
      %v448 = vpack.c.b16 %v433, %v432
      %v449 = vpack.c.b16 %v435, %v434
      %v450 = vpack.c.b16 %v437, %v436
      %v451 = vpack.c.b16 %v439, %v438
      %v452 = vpack.c.b16 %v441, %v440
      %v453 = vpack.c.b16 %v443, %v442
      %v454 = vpack.c.b16 %v445, %v444
      %v455 = vpack.c.b16 %v447, %v446
      %464 = vmatpush.bf16.msra.mxu0 %v455
      %465 = vmatpush.bf16.msra.mxu0 %v454
      %466 = vmatpush.bf16.msra.mxu0 %v453
      %467 = vmatpush.bf16.msra.mxu0 %v452
      %468 = vmatpush.bf16.msra.mxu0 %v451
      %469 = vmatpush.bf16.msra.mxu0 %v450
      %470 = vmatpush.bf16.msra.mxu0 %v449
      %471 = vmatpush.bf16.msra.mxu0 %v448
      %472 = vmatmul.bf16.gmra.mxu0 %v392
      %v473 = vpop.f32.mrf.mxu0
      %v474 = vadd.f32 %v414, %v473
      %v475 = vpop.f32.mrf.mxu0
      %v476 = vadd.f32 %v414, %v475
      %477 = vmatmul.bf16.gmra.mxu0 %v393
      %v478 = vpop.f32.mrf.mxu0
      %v479 = vadd.f32 %v414, %v478
      %v480 = vpop.f32.mrf.mxu0
      %v481 = vadd.f32 %v414, %v480
      %482 = vmatmul.bf16.gmra.mxu0 %v394
      %v483 = vpop.f32.mrf.mxu0
      %v484 = vadd.f32 %v414, %v483
      %v485 = vpop.f32.mrf.mxu0
      %v486 = vadd.f32 %v414, %v485
      %487 = vmatmul.bf16.gmra.mxu0 %v395
      %v488 = vpop.f32.mrf.mxu0
      %v489 = vadd.f32 %v414, %v488
      %v490 = vpop.f32.mrf.mxu0
      %v491 = vadd.f32 %v414, %v490
      %492 = vdwg.mxu0
      %vm493 = vcmask 130048
      %494 = vst.msk [vmem:[%s261] sm:$0xff] %vm493, %v474
      %495 = vst.msk [vmem:[%s261 + $0x8] sm:$0xff] %vm493, %v476
      %496 = vst.msk [vmem:[%s261 + $0x10] sm:$0xff] %vm493, %v479
      %497 = vst.msk [vmem:[%s261 + $0x18] sm:$0xff] %vm493, %v481
      %498 = vst.msk [vmem:[%s261 + $0x20] sm:$0xff] %vm493, %v484
      %499 = vst.msk [vmem:[%s261 + $0x28] sm:$0xff] %vm493, %v486
      %500 = vst.msk [vmem:[%s261 + $0x30] sm:$0xff] %vm493, %v489
      %501 = vst.msk [vmem:[%s261 + $0x38] sm:$0xff] %vm493, %v491
      %502 = vmax.xlane.f32.xlu0 %v474
      %v503 = vpop.xlane.xlu0 %502
      %504 = vmax.xlane.f32.xlu0 %v476
      %v505 = vpop.xlane.xlu0 %504
      %506 = vmax.xlane.f32.xlu0 %v479
      %v507 = vpop.xlane.xlu0 %506
      %508 = vmax.xlane.f32.xlu0 %v481
      %v509 = vpop.xlane.xlu0 %508
      %510 = vmax.xlane.f32.xlu0 %v484
      %v511 = vpop.xlane.xlu0 %510
      %512 = vmax.xlane.f32.xlu0 %v486
      %v513 = vpop.xlane.xlu0 %512
      %514 = vmax.xlane.f32.xlu0 %v489
      %v515 = vpop.xlane.xlu0 %514
      %516 = vmax.xlane.f32.xlu0 %v491
      %v517 = vpop.xlane.xlu0 %516
      %v518 = vsub.f32 %v474, %v503
      %v519 = vsub.f32 %v476, %v505
      %v520 = vsub.f32 %v479, %v507
      %v521 = vsub.f32 %v481, %v509
      %v522 = vsub.f32 %v484, %v511
      %v523 = vsub.f32 %v486, %v513
      %v524 = vsub.f32 %v489, %v515
      %v525 = vsub.f32 %v491, %v517
      %v526 = vmul.f32 %v518, 1.442695
      %v527 = vpow.pop %v526
      %v528 = vmul.f32 %v519, 1.442695
      %v529 = vpow.pop %v528
      %v530 = vmul.f32 %v520, 1.442695
      %v531 = vpow.pop %v530
      %v532 = vmul.f32 %v521, 1.442695
      %v533 = vpow.pop %v532
      %v534 = vmul.f32 %v522, 1.442695
      %v535 = vpow.pop %v534
      %v536 = vmul.f32 %v523, 1.442695
      %v537 = vpow.pop %v536
      %v538 = vmul.f32 %v524, 1.442695
      %v539 = vpow.pop %v538
      %v540 = vmul.f32 %v525, 1.442695
      %v541 = vpow.pop %v540
      %542 = vadd.xlane.f32.xlu0 %v527
      %v543 = vpop.xlane.xlu0 %542
      %544 = vadd.xlane.f32.xlu0 %v529
      %v545 = vpop.xlane.xlu0 %544
      %546 = vadd.xlane.f32.xlu0 %v531
      %v547 = vpop.xlane.xlu0 %546
      %548 = vadd.xlane.f32.xlu0 %v533
      %v549 = vpop.xlane.xlu0 %548
      %550 = vadd.xlane.f32.xlu0 %v535
      %v551 = vpop.xlane.xlu0 %550
      %552 = vadd.xlane.f32.xlu0 %v537
      %v553 = vpop.xlane.xlu0 %552
      %554 = vadd.xlane.f32.xlu0 %v539
      %v555 = vpop.xlane.xlu0 %554
      %556 = vadd.xlane.f32.xlu0 %v541
      %v557 = vpop.xlane.xlu0 %556
      %v558 = vrcp.pop %v543
      %v559 = vrcp.pop %v545
      %v560 = vrcp.pop %v547
      %v561 = vrcp.pop %v549
      %v562 = vrcp.pop %v551
      %v563 = vrcp.pop %v553
      %v564 = vrcp.pop %v555
      %v565 = vrcp.pop %v557
      %v566 = vmul.f32 %v543, %v558
      %v567 = vmul.f32 %v545, %v559
      %v568 = vmul.f32 %v547, %v560
      %v569 = vmul.f32 %v549, %v561
      %v570 = vmul.f32 %v551, %v562
      %v571 = vmul.f32 %v553, %v563
      %v572 = vmul.f32 %v555, %v564
      %v573 = vmul.f32 %v557, %v565
      %v574 = vsub.f32 2.0, %v566
      %v575 = vsub.f32 2.0, %v567
      %v576 = vsub.f32 2.0, %v568
      %v577 = vsub.f32 2.0, %v569
      %v578 = vsub.f32 2.0, %v570
      %v579 = vsub.f32 2.0, %v571
      %v580 = vsub.f32 2.0, %v572
      %v581 = vsub.f32 2.0, %v573
      %v582 = vmul.f32 %v558, %v574
      %v583 = vmul.f32 %v559, %v575
      %v584 = vmul.f32 %v560, %v576
      %v585 = vmul.f32 %v561, %v577
      %v586 = vmul.f32 %v562, %v578
      %v587 = vmul.f32 %v563, %v579
      %v588 = vmul.f32 %v564, %v580
      %v589 = vmul.f32 %v565, %v581
      %v590 = vmul.f32 %v527, %v582
      %v591 = vmul.f32 %v529, %v583
      %v592 = vmul.f32 %v531, %v584
      %v593 = vmul.f32 %v533, %v585
      %v594 = vmul.f32 %v535, %v586
      %v595 = vmul.f32 %v537, %v587
      %v596 = vmul.f32 %v539, %v588
      %v597 = vmul.f32 %v541, %v589
      %598 = vst.msk [vmem:[%s267] sm:$0xff] %vm493, %v590
      %599 = vst.msk [vmem:[%s267 + $0x8] sm:$0xff] %vm493, %v591
      %600 = vst.msk [vmem:[%s267 + $0x10] sm:$0xff] %vm493, %v592
      %601 = vst.msk [vmem:[%s267 + $0x18] sm:$0xff] %vm493, %v593
      %602 = vst.msk [vmem:[%s267 + $0x20] sm:$0xff] %vm493, %v594
      %603 = vst.msk [vmem:[%s267 + $0x28] sm:$0xff] %vm493, %v595
      %604 = vst.msk [vmem:[%s267 + $0x30] sm:$0xff] %vm493, %v596
      %605 = vst.msk [vmem:[%s267 + $0x38] sm:$0xff] %vm493, %v597
      %s606 = smul.u32 8, %s18
      %p607 = scmp.lt.s32.totalorder %s606, 15
      %s608 = scalar_select %p607, %s606, 15
      %s609 = smul.addr %s608, 8
      %s610 = scalar_lea.vmem %s5, %s609
      %s611 = smul.u32 8, %s18
      %p612 = scmp.lt.s32.totalorder %s611, 15
      %s613 = scalar_select %p612, %s611, 15
      %s614 = smul.addr %s613, 8
      %s615 = scalar_lea.vmem %s6, %s614
      // Predicated region
      $region41: #{tpu_custom_call.1} parent=39 // pred_check
        %p616 = pneg %p146
      $region42: #{tpu_custom_call.1} parent=39 // pred_check_branch
        %618 = sbr.rel (%p616) target = $region44
      $region43: #{tpu_custom_call.1} parent=39 // pred_region
        %s619 = smul.u32 8, %s18
      $region44: #{tpu_custom_call.1} parent=39 // pred_fallthru
        _
      // Predicated region
      $region45: #{tpu_custom_call.1} parent=39 // pred_check
        %p620 = pneg %p172
      $region46: #{tpu_custom_call.1} parent=39 // pred_check_branch
        %622 = sbr.rel (%p620) target = $region48
      $region47: #{tpu_custom_call.1} parent=39 // pred_region
        %s623 = smul.u32 8, %s18
      $region48: #{tpu_custom_call.1} parent=39 // pred_fallthru
        _
    $region40: #{tpu_custom_call.1} parent=5 // pred_fallthru
      _
    %p624 = scmp.le.s32.totalorder 2, %s13
    // Predicated region
    $region49: #{tpu_custom_call.1} parent=5 // pred_check
      %p625 = pneg %p624
    $region50: #{tpu_custom_call.1} parent=5 // pred_check_branch
      %627 = sbr.rel (%p625) target = $region52
    $region51: #{tpu_custom_call.1} parent=5 // pred_region
      %s628 = ssub.s32 %s13, 2
      // Predicated region
      $region53: #{tpu_custom_call.1} parent=51 // pred_check
        %p629 = pneg %p152
      $region54: #{tpu_custom_call.1} parent=51 // pred_check_branch
        %631 = sbr.rel (%p629) target = $region56
      $region55: #{tpu_custom_call.1} parent=51 // pred_region
        %s632 = smul.u32 8, %s19
        %p633 = scmp.lt.s32.totalorder %s632, 15
        %s634 = scalar_select %p633, %s632, 15
        %s635 = smul.addr %s634, 8
        %s636 = scalar_lea.vmem %s5, %s635
      $region56: #{tpu_custom_call.1} parent=51 // pred_fallthru
        _
      // Predicated region
      $region57: #{tpu_custom_call.1} parent=51 // pred_check
        %p637 = pneg %p178
      $region58: #{tpu_custom_call.1} parent=51 // pred_check_branch
        %639 = sbr.rel (%p637) target = $region60
      $region59: #{tpu_custom_call.1} parent=51 // pred_region
        %s640 = smul.u32 8, %s19
        %p641 = scmp.lt.s32.totalorder %s640, 15
        %s642 = scalar_select %p641, %s640, 15
        %s643 = smul.addr %s642, 8
        %s644 = scalar_lea.vmem %s6, %s643
      $region60: #{tpu_custom_call.1} parent=51 // pred_fallthru
        _
    $region52: #{tpu_custom_call.1} parent=5 // pred_fallthru
      _
  $region6: #{tpu_custom_call.1} parent=0 // loop_footer
    %s17 = sadd.s32 1, %s13
  $region7: #{tpu_custom_call.1} parent=0 // loop_footer_branch
    %12 = sbr.rel target = $region3
  $region8: #{tpu_custom_call.1} parent=0 // loop_exit
    _

// kernel: tpu_custom_call.1
$region0: #{tpu_custom_call.1}
  #allocation0 [shape = 'u32[]', space=smem, size = 0x4, offset = 0x4, fixed_abs, tag = 'smem constant byte address 0x4 - core index']
  #allocation1 [shape = 'u32[72,128]{1,0:T(1,128)}', space=vmem, size = 0x9000, scoped, tag = 'internal scratch']
  %s0 = inlined_call_operand.vmem [shape: bf16[128,32], index: 0, kind: input, shape index: {}]
  %s1 = inlined_call_operand.vmem [shape: bf16[32,128], index: 1, kind: input, shape index: {}]
  %s2 = inlined_call_operand.vmem [shape: f32[1,128], index: 2, kind: input, shape index: {}]
  %s3 = inlined_call_operand.vmem [shape: bf16[128,128], index: 3, kind: input, shape index: {}]
  %s4 = inlined_call_operand.vmem [shape: f32[1,128], index: 4, kind: input, shape index: {}]
  %s5 = inlined_call_operand.vmem [shape: f32[128,16], index: 5, kind: output, shape index: {0}]
  %s6 = inlined_call_operand.vmem [shape: f32[128,16], index: 6, kind: output, shape index: {1}]
  %7 = xla_tuple %s5, %s6
  %s8 = sld [smem:[#allocation0]]
  $region61: #{tpu_custom_call.1} parent=0
    _
  %s10 = ssub.s32 1, %s8
  %s11 = scalar_select 0, %s10, %s8
  loop: start=0, step=1, limit=4
  $region2: #{tpu_custom_call.1} parent=0 // loop_pre_header
    _
  $region3: #{tpu_custom_call.1} parent=0 // loop_header
    %s13 = sphi 0, %s17
    %p14 = scmp.ge.s32.totalorder %s13, 4
    %s23 = sphi 0, %s25
    %s26 = sphi 0, %s23
    %s27 = sphi 0, %s26
    %s43 = sphi 0, %s27
    %s47 = sphi 0, %s47
    %s49 = sphi 0, %s47
    %s50 = sphi 0, %s49
    %s64 = sphi 0, %s50
    %s68 = sphi 0, %s68
    %s70 = sphi 0, %s68
    %s71 = sphi 0, %s70
    %s85 = sphi 0, %s71
    %s89 = sphi 0, %s89
    %s91 = sphi 0, %s89
    %s92 = sphi 0, %s91
    %s106 = sphi 0, %s92
    %s110 = sphi 0, %s110
    %s112 = sphi 0, %s110
    %s113 = sphi 0, %s112
    %s127 = sphi 0, %s113
    %s133 = sphi 0, %s135
    %s136 = sphi 0, %s133
    %s137 = sphi 0, %s136
    %s153 = sphi 0, %s137
    %s159 = sphi 0, %s161
    %s162 = sphi 0, %s159
    %s163 = sphi 0, %s162
    %s179 = sphi 0, %s163
  $region4: #{tpu_custom_call.1} parent=0 // loop_header_branch
    %16 = sbr.rel (%p14) target = $region8
  $region5: #{tpu_custom_call.1} parent=0 // loop_body
    %s18 = ssub.s32 %s13, 1
    %s19 = ssub.s32 %s13, 2
    %s20 = sadd.s32 %s13, 1
    %s21 = ssub.s32 %s13, %s20
    %p22 = scmp.eq.s32.totalorder %s21, 0
    %s24 = sadd.s32 %s23, 1
    %s25 = scalar_select %p22, %s23, %s24
    %p28 = pneg %p22
    %p29 = scmp.eq.s32.totalorder %s13, 1
    %p30 = por %p28, %p29
    %p31 = scmp.ne.s32.totalorder %s23, %s26
    %p32 = scmp.eq.s32.totalorder %s13, 0
    %p33 = por %p31, %p32
    %p34 = scmp.ne.s32.totalorder %s23, %s26
    %p35 = scmp.eq.s32.totalorder %s18, 1
    %p36 = por %p34, %p35
    %p37 = scmp.ne.s32.totalorder %s26, %s27
    %p38 = scmp.eq.s32.totalorder %s18, 0
    %p39 = por %p37, %p38
    %p40 = scmp.ne.s32.totalorder %s26, %s27
    %p41 = scmp.eq.s32.totalorder %s19, 1
    %p42 = por %p40, %p41
    %p44 = scmp.ne.s32.totalorder %s27, %s43
    %p45 = scmp.eq.s32.totalorder %s19, 0
    %p46 = por %p44, %p45
    %s48 = sadd.s32 %s47, 1
    %p51 = scmp.eq.s32.totalorder %s13, 1
    %p52 = scmp.ne.s32.totalorder %s47, %s49
    %p53 = scmp.eq.s32.totalorder %s13, 0
    %p54 = por %p52, %p53
    %p55 = scmp.ne.s32.totalorder %s47, %s49
    %p56 = scmp.eq.s32.totalorder %s18, 1
    %p57 = por %p55, %p56
    %p58 = scmp.ne.s32.totalorder %s49, %s50
    %p59 = scmp.eq.s32.totalorder %s18, 0
    %p60 = por %p58, %p59
    %p61 = scmp.ne.s32.totalorder %s49, %s50
    %p62 = scmp.eq.s32.totalorder %s19, 1
    %p63 = por %p61, %p62
    %p65 = scmp.ne.s32.totalorder %s50, %s64
    %p66 = scmp.eq.s32.totalorder %s19, 0
    %p67 = por %p65, %p66
    %s69 = sadd.s32 %s68, 1
    %p72 = scmp.eq.s32.totalorder %s13, 1
    %p73 = scmp.ne.s32.totalorder %s68, %s70
    %p74 = scmp.eq.s32.totalorder %s13, 0
    %p75 = por %p73, %p74
    %p76 = scmp.ne.s32.totalorder %s68, %s70
    %p77 = scmp.eq.s32.totalorder %s18, 1
    %p78 = por %p76, %p77
    %p79 = scmp.ne.s32.totalorder %s70, %s71
    %p80 = scmp.eq.s32.totalorder %s18, 0
    %p81 = por %p79, %p80
    %p82 = scmp.ne.s32.totalorder %s70, %s71
    %p83 = scmp.eq.s32.totalorder %s19, 1
    %p84 = por %p82, %p83
    %p86 = scmp.ne.s32.totalorder %s71, %s85
    %p87 = scmp.eq.s32.totalorder %s19, 0
    %p88 = por %p86, %p87
    %s90 = sadd.s32 %s89, 1
    %p93 = scmp.eq.s32.totalorder %s13, 1
    %p94 = scmp.ne.s32.totalorder %s89, %s91
    %p95 = scmp.eq.s32.totalorder %s13, 0
    %p96 = por %p94, %p95
    %p97 = scmp.ne.s32.totalorder %s89, %s91
    %p98 = scmp.eq.s32.totalorder %s18, 1
    %p99 = por %p97, %p98
    %p100 = scmp.ne.s32.totalorder %s91, %s92
    %p101 = scmp.eq.s32.totalorder %s18, 0
    %p102 = por %p100, %p101
    %p103 = scmp.ne.s32.totalorder %s91, %s92
    %p104 = scmp.eq.s32.totalorder %s19, 1
    %p105 = por %p103, %p104
    %p107 = scmp.ne.s32.totalorder %s92, %s106
    %p108 = scmp.eq.s32.totalorder %s19, 0
    %p109 = por %p107, %p108
    %s111 = sadd.s32 %s110, 1
    %p114 = scmp.eq.s32.totalorder %s13, 1
    %p115 = scmp.ne.s32.totalorder %s110, %s112
    %p116 = scmp.eq.s32.totalorder %s13, 0
    %p117 = por %p115, %p116
    %p118 = scmp.ne.s32.totalorder %s110, %s112
    %p119 = scmp.eq.s32.totalorder %s18, 1
    %p120 = por %p118, %p119
    %p121 = scmp.ne.s32.totalorder %s112, %s113
    %p122 = scmp.eq.s32.totalorder %s18, 0
    %p123 = por %p121, %p122
    %p124 = scmp.ne.s32.totalorder %s112, %s113
    %p125 = scmp.eq.s32.totalorder %s19, 1
    %p126 = por %p124, %p125
    %p128 = scmp.ne.s32.totalorder %s113, %s127
    %p129 = scmp.eq.s32.totalorder %s19, 0
    %p130 = por %p128, %p129
    %s131 = ssub.s32 %s13, %s20
    %p132 = scmp.eq.s32.totalorder %s131, 0
    %s134 = sadd.s32 %s133, 1
    %s135 = scalar_select %p132, %s133, %s134
    %p138 = pneg %p132
    %p139 = scmp.eq.s32.totalorder %s13, 1
    %p140 = por %p138, %p139
    %p141 = scmp.ne.s32.totalorder %s133, %s136
    %p142 = scmp.eq.s32.totalorder %s13, 0
    %p143 = por %p141, %p142
    %p144 = scmp.ne.s32.totalorder %s133, %s136
    %p145 = scmp.eq.s32.totalorder %s18, 1
    %p146 = por %p144, %p145
    %p147 = scmp.ne.s32.totalorder %s136, %s137
    %p148 = scmp.eq.s32.totalorder %s18, 0
    %p149 = por %p147, %p148
    %p150 = scmp.ne.s32.totalorder %s136, %s137
    %p151 = scmp.eq.s32.totalorder %s19, 1
    %p152 = por %p150, %p151
    %p154 = scmp.ne.s32.totalorder %s137, %s153
    %p155 = scmp.eq.s32.totalorder %s19, 0
    %p156 = por %p154, %p155
    %s157 = ssub.s32 %s13, %s20
    %p158 = scmp.eq.s32.totalorder %s157, 0
    %s160 = sadd.s32 %s159, 1
    %s161 = scalar_select %p158, %s159, %s160
    %p164 = pneg %p158
    %p165 = scmp.eq.s32.totalorder %s13, 1
    %p166 = por %p164, %p165
    %p167 = scmp.ne.s32.totalorder %s159, %s162
    %p168 = scmp.eq.s32.totalorder %s13, 0
    %p169 = por %p167, %p168
    %p170 = scmp.ne.s32.totalorder %s159, %s162
    %p171 = scmp.eq.s32.totalorder %s18, 1
    %p172 = por %p170, %p171
    %p173 = scmp.ne.s32.totalorder %s162, %s163
    %p174 = scmp.eq.s32.totalorder %s18, 0
    %p175 = por %p173, %p174
    %p176 = scmp.ne.s32.totalorder %s162, %s163
    %p177 = scmp.eq.s32.totalorder %s19, 1
    %p178 = por %p176, %p177
    %p180 = scmp.ne.s32.totalorder %s163, %s179
    %p181 = scmp.eq.s32.totalorder %s19, 0
    %p182 = por %p180, %p181
    %p183 = scmp.le.s32.totalorder 1, %s13
    %p184 = scmp.lt.s32.totalorder %s13, 3
    %p185 = pnand %p183, %p184
    %p186 = pneg %p185
    // Predicated region
    $region9: #{tpu_custom_call.1} parent=5 // pred_check
      _
    $region10: #{tpu_custom_call.1} parent=5 // pred_check_branch
      %188 = sbr.rel (%p185) target = $region12
    $region11: #{tpu_custom_call.1} parent=5 // pred_region
      %s189 = ssub.s32 %s13, 1
      // Predicated region
      $region13: #{tpu_custom_call.1} parent=11 // pred_check
        %p190 = pneg %p60
      $region14: #{tpu_custom_call.1} parent=11 // pred_check_branch
        %192 = sbr.rel (%p190) target = $region16
      $region15: #{tpu_custom_call.1} parent=11 // pred_region
        _
      $region16: #{tpu_custom_call.1} parent=11 // pred_fallthru
        _
      // Predicated region
      $region17: #{tpu_custom_call.1} parent=11 // pred_check
        %p193 = pneg %p81
      $region18: #{tpu_custom_call.1} parent=11 // pred_check_branch
        %195 = sbr.rel (%p193) target = $region20
      $region19: #{tpu_custom_call.1} parent=11 // pred_region
        _
      $region20: #{tpu_custom_call.1} parent=11 // pred_fallthru
        _
      // Predicated region
      $region21: #{tpu_custom_call.1} parent=11 // pred_check
        %p196 = pneg %p102
      $region22: #{tpu_custom_call.1} parent=11 // pred_check_branch
        %198 = sbr.rel (%p196) target = $region24
      $region23: #{tpu_custom_call.1} parent=11 // pred_region
        _
      $region24: #{tpu_custom_call.1} parent=11 // pred_fallthru
        _
      // Predicated region
      $region25: #{tpu_custom_call.1} parent=11 // pred_check
        %p199 = pneg %p123
      $region26: #{tpu_custom_call.1} parent=11 // pred_check_branch
        %201 = sbr.rel (%p199) target = $region28
      $region27: #{tpu_custom_call.1} parent=11 // pred_region
        _
      $region28: #{tpu_custom_call.1} parent=11 // pred_fallthru
        _
    $region12: #{tpu_custom_call.1} parent=5 // pred_fallthru
      _
    %p202 = scmp.lt.s32.totalorder %s13, 2
    // Predicated region
    $region29: #{tpu_custom_call.1} parent=5 // pred_check
      %p203 = pneg %p202
    $region30: #{tpu_custom_call.1} parent=5 // pred_check_branch
      %205 = sbr.rel (%p203) target = $region32
    $region31: #{tpu_custom_call.1} parent=5 // pred_region
      // Predicated region
      $region33: #{tpu_custom_call.1} parent=31 // pred_check
        %p206 = pneg %p33
      $region34: #{tpu_custom_call.1} parent=31 // pred_check_branch
        %208 = sbr.rel (%p206) target = $region36
      $region35: #{tpu_custom_call.1} parent=31 // pred_region
        %s209 = smul.u32 8, %s13
        %p210 = scmp.lt.s32.totalorder %s209, 15
        %s211 = scalar_select %p210, %s209, 15
        %s212 = smul.addr %s211, 4
        %s213 = scalar_lea.vmem %s0, %s212
        %s214 = smul.u32 8, %s13
      $region36: #{tpu_custom_call.1} parent=31 // pred_fallthru
        _
    $region32: #{tpu_custom_call.1} parent=5 // pred_fallthru
      _
    %p215 = scmp.le.s32.totalorder 1, %s13
    %p216 = scmp.lt.s32.totalorder %s13, 3
    %p217 = pnand %p215, %p216
    %p218 = pneg %p217
    // Predicated region
    $region37: #{tpu_custom_call.1} parent=5 // pred_check
      _
    $region38: #{tpu_custom_call.1} parent=5 // pred_check_branch
      %220 = sbr.rel (%p217) target = $region40
    $region39: #{tpu_custom_call.1} parent=5 // pred_region
      %s221 = ssub.s32 %s13, 1
      %s222 = smul.u32 8, %s18
      %p223 = scmp.lt.s32.totalorder %s222, 15
      %s224 = scalar_select %p223, %s222, 15
      %s225 = smul.addr %s224, 4
      %s226 = scalar_lea.vmem %s0, %s225
      %p227 = pneg %p39
      %p228 = pneg %p36
      %p229 = pneg %p60
      %p230 = pneg %p57
      %p231 = pneg %p81
      %p232 = pneg %p78
      %p233 = pneg %p102
      %p234 = pneg %p99
      %p235 = pneg %p123
      %p236 = pneg %p120
      %p237 = pneg %p149
      %p238 = pneg %p146
      %s239 = smul.u32 8, %s18
      %p240 = scmp.lt.s32.totalorder %s239, 15
      %s241 = scalar_select %p240, %s239, 15
      %s242 = smul.addr %s241, 8
      %s243 = scalar_lea.vmem %s5, %s242
      %p244 = pneg %p175
      %p245 = pneg %p172
      %s246 = smul.u32 8, %s18
      %p247 = scmp.lt.s32.totalorder %s246, 15
      %s248 = scalar_select %p247, %s246, 15
      %s249 = smul.addr %s248, 8
      %s250 = scalar_lea.vmem %s6, %s249
      %s251 = smul.u32 8, %s18
      %p252 = scmp.lt.s32.totalorder %s251, 15
      %s253 = scalar_select %p252, %s251, 15
      %s254 = smul.addr %s253, 4
      %s255 = scalar_lea.vmem %s0, %s254
      %s256 = smul.u32 8, %s18
      %s257 = smul.u32 8, %s18
      %p258 = scmp.lt.s32.totalorder %s257, 15
      %s259 = scalar_select %p258, %s257, 15
      %s260 = smul.addr %s259, 8
      %s261 = scalar_lea.vmem %s5, %s260
      %s262 = smul.u32 8, %s18
      %s263 = smul.u32 8, %s18
      %p264 = scmp.lt.s32.totalorder %s263, 15
      %s265 = scalar_select %p264, %s263, 15
      %s266 = smul.addr %s265, 8
      %s267 = scalar_lea.vmem %s6, %s266
      %s268 = smul.u32 8, %s18
      %v270 = vld [vmem:[%s255] sm:$0xf]
      %v271 = vld [vmem:[%s255 + $0x4] sm:$0xf]
      %v272 = vld [vmem:[%s255 + $0x8] sm:$0xf]
      %v273 = vld [vmem:[%s255 + $0xc] sm:$0xf]
      %v274 = vld [vmem:[%s255 + $0x10] sm:$0xf]
      %v275 = vld [vmem:[%s255 + $0x14] sm:$0xf]
      %v276 = vld [vmem:[%s255 + $0x18] sm:$0xf]
      %v277 = vld [vmem:[%s255 + $0x1c] sm:$0xf]
      %v278 = vld [vmem:[%s1] sm:$0xf]
      %v279 = vld [vmem:[%s1 + $0x4] sm:$0xf]
      %v280 = vld [vmem:[%s1 + $0x8] sm:$0xf]
      %v281 = vld [vmem:[%s1 + $0xc] sm:$0xf]
      %v282 = vld [vmem:[%s2] sm:$0x1]
      %v284 = vperm.slane %v282, 0
      %v294 = vunpack.c.l.b16 %v270
      %v295 = vunpack.c.l.b16 %v271
      %v296 = vunpack.c.l.b16 %v272
      %v297 = vunpack.c.l.b16 %v273
      %v298 = vunpack.c.l.b16 %v274
      %v299 = vunpack.c.l.b16 %v275
      %v300 = vunpack.c.l.b16 %v276
      %v301 = vunpack.c.l.b16 %v277
      %v302 = vpack.c.b16 %v295, %v294
      %v303 = vpack.c.b16 %v297, %v296
      %v304 = vpack.c.b16 %v299, %v298
      %v305 = vpack.c.b16 %v301, %v300
      %v310 = vunpack.c.l.b16 %v278
      %v311 = vunpack.c.l.b16 %v279
      %v312 = vunpack.c.l.b16 %v280
      %v313 = vunpack.c.l.b16 %v281
      %v314 = vpack.c.b16 %v311, %v310
      %v315 = vpack.c.b16 %v313, %v312
      %vm318 = vcmask 261120
      %v320 = vsel %vm318, %v302, 0
      %v323 = vsel %vm318, %v303, 0
      %v326 = vsel %vm318, %v304, 0
      %v329 = vsel %vm318, %v305, 0
      %331 = vmatpush.bf16.msra.mxu0 0
      %332 = vmatpush.bf16.msra.mxu0 0
      %333 = vmatpush.bf16.msra.mxu0 0
      %334 = vmatpush.bf16.msra.mxu0 0
      %335 = vmatpush.bf16.msra.mxu0 0
      %336 = vmatpush.bf16.msra.mxu0 0
      %337 = vmatpush.bf16.msra.mxu0 %v315
      %338 = vmatpush.bf16.msra.mxu0 %v314
      %339 = vmatmul.bf16.gmra.mxu0 %v320
      %v340 = vpop.f32.mrf.mxu0
      %v341 = vadd.f32 %v284, %v340
      %v342 = vpop.f32.mrf.mxu0
      %v343 = vadd.f32 %v284, %v342
      %344 = vmatmul.bf16.gmra.mxu0 %v323
      %v345 = vpop.f32.mrf.mxu0
      %v346 = vadd.f32 %v284, %v345
      %v347 = vpop.f32.mrf.mxu0
      %v348 = vadd.f32 %v284, %v347
      %349 = vmatmul.bf16.gmra.mxu0 %v326
      %v350 = vpop.f32.mrf.mxu0
      %v351 = vadd.f32 %v284, %v350
      %v352 = vpop.f32.mrf.mxu0
      %v353 = vadd.f32 %v284, %v352
      %354 = vmatmul.bf16.gmra.mxu0 %v329
      %v355 = vpop.f32.mrf.mxu0
      %v356 = vadd.f32 %v284, %v355
      %v357 = vpop.f32.mrf.mxu0
      %v358 = vadd.f32 %v284, %v357
      %359 = vdwg.mxu0
      %v360 = vmul.f32 %v341, 0.5
      %v361 = vmul.f32 %v343, 0.5
      %v362 = vmul.f32 %v346, 0.5
      %v363 = vmul.f32 %v348, 0.5
      %v364 = vmul.f32 %v351, 0.5
      %v365 = vmul.f32 %v353, 0.5
      %v366 = vmul.f32 %v356, 0.5
      %v367 = vmul.f32 %v358, 0.5
      %v368 = vtanh.pop %v360
      %v369 = vtanh.pop %v361
      %v370 = vtanh.pop %v362
      %v371 = vtanh.pop %v363
      %v372 = vtanh.pop %v364
      %v373 = vtanh.pop %v365
      %v374 = vtanh.pop %v366
      %v375 = vtanh.pop %v367
      %v376 = vadd.f32 %v368, 1.0
      %v377 = vadd.f32 %v369, 1.0
      %v378 = vadd.f32 %v370, 1.0
      %v379 = vadd.f32 %v371, 1.0
      %v380 = vadd.f32 %v372, 1.0
      %v381 = vadd.f32 %v373, 1.0
      %v382 = vadd.f32 %v374, 1.0
      %v383 = vadd.f32 %v375, 1.0
      %v384 = vmul.f32 %v376, 0.5
      %v385 = vmul.f32 %v377, 0.5
      %v386 = vmul.f32 %v378, 0.5
      %v387 = vmul.f32 %v379, 0.5
      %v388 = vmul.f32 %v380, 0.5
      %v389 = vmul.f32 %v381, 0.5
      %v390 = vmul.f32 %v382, 0.5
      %v391 = vmul.f32 %v383, 0.5
      %v392 = vpack.c.bf16 %v385, %v384
      %v393 = vpack.c.bf16 %v387, %v386
      %v394 = vpack.c.bf16 %v389, %v388
      %v395 = vpack.c.bf16 %v391, %v390
      %v396 = vld [vmem:[%s3] sm:$0xf]
      %v397 = vld [vmem:[%s3 + $0x4] sm:$0xf]
      %v398 = vld [vmem:[%s3 + $0x8] sm:$0xf]
      %v399 = vld [vmem:[%s3 + $0xc] sm:$0xf]
      %v400 = vld [vmem:[%s3 + $0x10] sm:$0xf]
      %v401 = vld [vmem:[%s3 + $0x14] sm:$0xf]
      %v402 = vld [vmem:[%s3 + $0x18] sm:$0xf]
      %v403 = vld [vmem:[%s3 + $0x1c] sm:$0xf]
      %v404 = vld [vmem:[%s3 + $0x20] sm:$0xf]
      %v405 = vld [vmem:[%s3 + $0x24] sm:$0xf]
      %v406 = vld [vmem:[%s3 + $0x28] sm:$0xf]
      %v407 = vld [vmem:[%s3 + $0x2c] sm:$0xf]
      %v408 = vld [vmem:[%s3 + $0x30] sm:$0xf]
      %v409 = vld [vmem:[%s3 + $0x34] sm:$0xf]
      %v410 = vld [vmem:[%s3 + $0x38] sm:$0xf]
      %v411 = vld [vmem:[%s3 + $0x3c] sm:$0xf]
      %v412 = vld [vmem:[%s4] sm:$0x1]
      %v414 = vperm.slane %v412, 0
      %v432 = vunpack.c.l.b16 %v396
      %v433 = vunpack.c.l.b16 %v397
      %v434 = vunpack.c.l.b16 %v398
      %v435 = vunpack.c.l.b16 %v399
      %v436 = vunpack.c.l.b16 %v400
      %v437 = vunpack.c.l.b16 %v401
      %v438 = vunpack.c.l.b16 %v402
      %v439 = vunpack.c.l.b16 %v403
      %v440 = vunpack.c.l.b16 %v404
      %v441 = vunpack.c.l.b16 %v405
      %v442 = vunpack.c.l.b16 %v406
      %v443 = vunpack.c.l.b16 %v407
      %v444 = vunpack.c.l.b16 %v408
      %v445 = vunpack.c.l.b16 %v409
      %v446 = vunpack.c.l.b16 %v410
      %v447 = vunpack.c.l.b16 %v411
      %v448 = vpack.c.b16 %v433, %v432
      %v449 = vpack.c.b16 %v435, %v434
      %v450 = vpack.c.b16 %v437, %v436
      %v451 = vpack.c.b16 %v439, %v438
      %v452 = vpack.c.b16 %v441, %v440
      %v453 = vpack.c.b16 %v443, %v442
      %v454 = vpack.c.b16 %v445, %v444
      %v455 = vpack.c.b16 %v447, %v446
      %464 = vmatpush.bf16.msra.mxu0 %v455
      %465 = vmatpush.bf16.msra.mxu0 %v454
      %466 = vmatpush.bf16.msra.mxu0 %v453
      %467 = vmatpush.bf16.msra.mxu0 %v452
      %468 = vmatpush.bf16.msra.mxu0 %v451
      %469 = vmatpush.bf16.msra.mxu0 %v450
      %470 = vmatpush.bf16.msra.mxu0 %v449
      %471 = vmatpush.bf16.msra.mxu0 %v448
      %472 = vmatmul.bf16.gmra.mxu0 %v392
      %v473 = vpop.f32.mrf.mxu0
      %v474 = vadd.f32 %v414, %v473
      %v475 = vpop.f32.mrf.mxu0
      %v476 = vadd.f32 %v414, %v475
      %477 = vmatmul.bf16.gmra.mxu0 %v393
      %v478 = vpop.f32.mrf.mxu0
      %v479 = vadd.f32 %v414, %v478
      %v480 = vpop.f32.mrf.mxu0
      %v481 = vadd.f32 %v414, %v480
      %482 = vmatmul.bf16.gmra.mxu0 %v394
      %v483 = vpop.f32.mrf.mxu0
      %v484 = vadd.f32 %v414, %v483
      %v485 = vpop.f32.mrf.mxu0
      %v486 = vadd.f32 %v414, %v485
      %487 = vmatmul.bf16.gmra.mxu0 %v395
      %v488 = vpop.f32.mrf.mxu0
      %v489 = vadd.f32 %v414, %v488
      %v490 = vpop.f32.mrf.mxu0
      %v491 = vadd.f32 %v414, %v490
      %492 = vdwg.mxu0
      %vm493 = vcmask 130048
      %494 = vst.msk [vmem:[%s261] sm:$0xff] %vm493, %v474
      %495 = vst.msk [vmem:[%s261 + $0x8] sm:$0xff] %vm493, %v476
      %496 = vst.msk [vmem:[%s261 + $0x10] sm:$0xff] %vm493, %v479
      %497 = vst.msk [vmem:[%s261 + $0x18] sm:$0xff] %vm493, %v481
      %498 = vst.msk [vmem:[%s261 + $0x20] sm:$0xff] %vm493, %v484
      %499 = vst.msk [vmem:[%s261 + $0x28] sm:$0xff] %vm493, %v486
      %500 = vst.msk [vmem:[%s261 + $0x30] sm:$0xff] %vm493, %v489
      %501 = vst.msk [vmem:[%s261 + $0x38] sm:$0xff] %vm493, %v491
      %502 = vmax.xlane.f32.xlu0 %v474
      %v503 = vpop.xlane.xlu0 %502
      %504 = vmax.xlane.f32.xlu0 %v476
      %v505 = vpop.xlane.xlu0 %504
      %506 = vmax.xlane.f32.xlu0 %v479
      %v507 = vpop.xlane.xlu0 %506
      %508 = vmax.xlane.f32.xlu0 %v481
      %v509 = vpop.xlane.xlu0 %508
      %510 = vmax.xlane.f32.xlu0 %v484
      %v511 = vpop.xlane.xlu0 %510
      %512 = vmax.xlane.f32.xlu0 %v486
      %v513 = vpop.xlane.xlu0 %512
      %514 = vmax.xlane.f32.xlu0 %v489
      %v515 = vpop.xlane.xlu0 %514
      %516 = vmax.xlane.f32.xlu0 %v491
      %v517 = vpop.xlane.xlu0 %516
      %v518 = vsub.f32 %v474, %v503
      %v519 = vsub.f32 %v476, %v505
      %v520 = vsub.f32 %v479, %v507
      %v521 = vsub.f32 %v481, %v509
      %v522 = vsub.f32 %v484, %v511
      %v523 = vsub.f32 %v486, %v513
      %v524 = vsub.f32 %v489, %v515
      %v525 = vsub.f32 %v491, %v517
      %v526 = vmul.f32 %v518, 1.442695
      %v527 = vpow.pop %v526
      %v528 = vmul.f32 %v519, 1.442695
      %v529 = vpow.pop %v528
      %v530 = vmul.f32 %v520, 1.442695
      %v531 = vpow.pop %v530
      %v532 = vmul.f32 %v521, 1.442695
      %v533 = vpow.pop %v532
      %v534 = vmul.f32 %v522, 1.442695
      %v535 = vpow.pop %v534
      %v536 = vmul.f32 %v523, 1.442695
      %v537 = vpow.pop %v536
      %v538 = vmul.f32 %v524, 1.442695
      %v539 = vpow.pop %v538
      %v540 = vmul.f32 %v525, 1.442695
      %v541 = vpow.pop %v540
      %542 = vadd.xlane.f32.xlu0 %v527
      %v543 = vpop.xlane.xlu0 %542
      %544 = vadd.xlane.f32.xlu0 %v529
      %v545 = vpop.xlane.xlu0 %544
      %546 = vadd.xlane.f32.xlu0 %v531
      %v547 = vpop.xlane.xlu0 %546
      %548 = vadd.xlane.f32.xlu0 %v533
      %v549 = vpop.xlane.xlu0 %548
      %550 = vadd.xlane.f32.xlu0 %v535
      %v551 = vpop.xlane.xlu0 %550
      %552 = vadd.xlane.f32.xlu0 %v537
      %v553 = vpop.xlane.xlu0 %552
      %554 = vadd.xlane.f32.xlu0 %v539
      %v555 = vpop.xlane.xlu0 %554
      %556 = vadd.xlane.f32.xlu0 %v541
      %v557 = vpop.xlane.xlu0 %556
      %v558 = vrcp.pop %v543
      %v559 = vrcp.pop %v545
      %v560 = vrcp.pop %v547
      %v561 = vrcp.pop %v549
      %v562 = vrcp.pop %v551
      %v563 = vrcp.pop %v553
      %v564 = vrcp.pop %v555
      %v565 = vrcp.pop %v557
      %v566 = vmul.f32 %v543, %v558
      %v567 = vmul.f32 %v545, %v559
      %v568 = vmul.f32 %v547, %v560
      %v569 = vmul.f32 %v549, %v561
      %v570 = vmul.f32 %v551, %v562
      %v571 = vmul.f32 %v553, %v563
      %v572 = vmul.f32 %v555, %v564
      %v573 = vmul.f32 %v557, %v565
      %v574 = vsub.f32 2.0, %v566
      %v575 = vsub.f32 2.0, %v567
      %v576 = vsub.f32 2.0, %v568
      %v577 = vsub.f32 2.0, %v569
      %v578 = vsub.f32 2.0, %v570
      %v579 = vsub.f32 2.0, %v571
      %v580 = vsub.f32 2.0, %v572
      %v581 = vsub.f32 2.0, %v573
      %v582 = vmul.f32 %v558, %v574
      %v583 = vmul.f32 %v559, %v575
      %v584 = vmul.f32 %v560, %v576
      %v585 = vmul.f32 %v561, %v577
      %v586 = vmul.f32 %v562, %v578
      %v587 = vmul.f32 %v563, %v579
      %v588 = vmul.f32 %v564, %v580
      %v589 = vmul.f32 %v565, %v581
      %v590 = vmul.f32 %v527, %v582
      %v591 = vmul.f32 %v529, %v583
      %v592 = vmul.f32 %v531, %v584
      %v593 = vmul.f32 %v533, %v585
      %v594 = vmul.f32 %v535, %v586
      %v595 = vmul.f32 %v537, %v587
      %v596 = vmul.f32 %v539, %v588
      %v597 = vmul.f32 %v541, %v589
      %598 = vst.msk [vmem:[%s267] sm:$0xff] %vm493, %v590
      %599 = vst.msk [vmem:[%s267 + $0x8] sm:$0xff] %vm493, %v591
      %600 = vst.msk [vmem:[%s267 + $0x10] sm:$0xff] %vm493, %v592
      %601 = vst.msk [vmem:[%s267 + $0x18] sm:$0xff] %vm493, %v593
      %602 = vst.msk [vmem:[%s267 + $0x20] sm:$0xff] %vm493, %v594
      %603 = vst.msk [vmem:[%s267 + $0x28] sm:$0xff] %vm493, %v595
      %604 = vst.msk [vmem:[%s267 + $0x30] sm:$0xff] %vm493, %v596
      %605 = vst.msk [vmem:[%s267 + $0x38] sm:$0xff] %vm493, %v597
      %s606 = smul.u32 8, %s18
      %p607 = scmp.lt.s32.totalorder %s606, 15
      %s608 = scalar_select %p607, %s606, 15
      %s609 = smul.addr %s608, 8
      %s610 = scalar_lea.vmem %s5, %s609
      %s611 = smul.u32 8, %s18
      %p612 = scmp.lt.s32.totalorder %s611, 15
      %s613 = scalar_select %p612, %s611, 15
      %s614 = smul.addr %s613, 8
      %s615 = scalar_lea.vmem %s6, %s614
      // Predicated region
      $region41: #{tpu_custom_call.1} parent=39 // pred_check
        %p616 = pneg %p146
      $region42: #{tpu_custom_call.1} parent=39 // pred_check_branch
        %618 = sbr.rel (%p616) target = $region44
      $region43: #{tpu_custom_call.1} parent=39 // pred_region
        %s619 = smul.u32 8, %s18
      $region44: #{tpu_custom_call.1} parent=39 // pred_fallthru
        _
      // Predicated region
      $region45: #{tpu_custom_call.1} parent=39 // pred_check
        %p620 = pneg %p172
      $region46: #{tpu_custom_call.1} parent=39 // pred_check_branch
        %622 = sbr.rel (%p620) target = $region48
      $region47: #{tpu_custom_call.1} parent=39 // pred_region
        %s623 = smul.u32 8, %s18
      $region48: #{tpu_custom_call.1} parent=39 // pred_fallthru
        _
    $region40: #{tpu_custom_call.1} parent=5 // pred_fallthru
      _
    %p624 = scmp.le.s32.totalorder 2, %s13
    // Predicated region
    $region49: #{tpu_custom_call.1} parent=5 // pred_check
      %p625 = pneg %p624
    $region50: #{tpu_custom_call.1} parent=5 // pred_check_branch
      %627 = sbr.rel (%p625) target = $region52
    $region51: #{tpu_custom_call.1} parent=5 // pred_region
      %s628 = ssub.s32 %s13, 2
      // Predicated region
      $region53: #{tpu_custom_call.1} parent=51 // pred_check
        %p629 = pneg %p152
      $region54: #{tpu_custom_call.1} parent=51 // pred_check_branch
        %631 = sbr.rel (%p629) target = $region56
      $region55: #{tpu_custom_call.1} parent=51 // pred_region
        %s632 = smul.u32 8, %s19
        %p633 = scmp.lt.s32.totalorder %s632, 15
        %s634 = scalar_select %p633, %s632, 15
        %s635 = smul.addr %s634, 8
        %s636 = scalar_lea.vmem %s5, %s635
      $region56: #{tpu_custom_call.1} parent=51 // pred_fallthru
        _
      // Predicated region
      $region57: #{tpu_custom_call.1} parent=51 // pred_check
        %p637 = pneg %p178
      $region58: #{tpu_custom_call.1} parent=51 // pred_check_branch
        %639 = sbr.rel (%p637) target = $region60
      $region59: #{tpu_custom_call.1} parent=51 // pred_region
        %s640 = smul.u32 8, %s19
        %p641 = scmp.lt.s32.totalorder %s640, 15
        %s642 = scalar_select %p641, %s640, 15
        %s643 = smul.addr %s642, 8
        %s644 = scalar_lea.vmem %s6, %s643
      $region60: #{tpu_custom_call.1} parent=51 // pred_fallthru
        _
    $region52: #{tpu_custom_call.1} parent=5 // pred_fallthru
      _
  $region6: #{tpu_custom_call.1} parent=0 // loop_footer
    %s17 = sadd.s32 1, %s13
  $region7: #{tpu_custom_call.1} parent=0 // loop_footer_branch
    %12 = sbr.rel target = $region3
  $region8: #{tpu_custom_call.1} parent=0 // loop_exit
    _

</llo_original>
